<compile_context>
chip_gen: v5e
topology: v5e:2x2
jax: 0.10.0
libtpu: 0.0.40
codegen_flags: <defaults>
</compile_context>

<pallas_src>
import functools

import jax
import jax.numpy as jnp
from jax.experimental import pallas as pl
from jax.experimental.pallas import tpu as pltpu

LANE = 128
SUBLANE = 8


def _round_up(x: int, m: int) -> int:
    return ((x + m - 1) // m) * m


def _vmem_limit(n_f32: int) -> int:
    """Scoped-VMEM budget: ~2x the resident f32 footprint, capped at 48 MiB."""
    need = 4 * n_f32
    return int(min(48 * 1024 * 1024, max(4 * 1024 * 1024, 2 * need)))


def _pick_row_tile(rows: int, k: int, n: int,
                   max_tile: int = 1024, budget: int = 24 * 1024 * 1024) -> int:
    """Row tile for the big x-side GEMM: as large as fits a conservative budget."""
    bm_x = min(max_tile, _round_up(rows, SUBLANE))
    bm_x = max(SUBLANE, (bm_x // SUBLANE) * SUBLANE)
    while bm_x > SUBLANE:
        fp = 4 * (2 * bm_x * (k + 2 * n) + 2 * k * n)
        if fp <= budget:
            break
        bm_x = max(SUBLANE, ((bm_x // 2) // SUBLANE) * SUBLANE)
    return bm_x


def pick_batch_tile(batch: int) -> int:
    """>=2 parallel batch tiles when the padded batch allows it (v7x has 2 TCs)."""
    b8 = _round_up(max(batch, SUBLANE), SUBLANE)
    if b8 >= 16:
        return min(128, _round_up((b8 + 1) // 2, SUBLANE))
    return b8


# ----------------------------------------------------------------------------
# Big (time-hoisted) x-side GEMM kernel:  (rows, K) @ (K, 3*Hp) -> (rows, 3*Hp)
# ----------------------------------------------------------------------------
def _matmul_kernel(x_ref, w_ref, o_ref):
    x = x_ref[...].astype(w_ref.dtype)
    o_ref[...] = jnp.dot(x, w_ref[...],
                         preferred_element_type=jnp.float32).astype(o_ref.dtype)


def _matmul_call(x, w, *, bm_rows):
    R, K = x.shape
    _, N = w.shape
    n_f32 = 2 * K * N + 2 * bm_rows * (K + N) + 2 * bm_rows * N
    return pl.pallas_call(
        _matmul_kernel,
        out_shape=jax.ShapeDtypeStruct((R, N), jnp.float32),
        grid_spec=pltpu.PrefetchScalarGridSpec(
            num_scalar_prefetch=0,
            grid=(R // bm_rows,),
            in_specs=[
                pl.BlockSpec((bm_rows, K), lambda i: (i, 0)),
                pl.BlockSpec((K, N), lambda i: (0, 0)),          # resident weights
            ],
            out_specs=pl.BlockSpec((bm_rows, N), lambda i: (i, 0)),
        ),
        compiler_params=pltpu.CompilerParams(
            dimension_semantics=("parallel",),
            vmem_limit_bytes=_vmem_limit(n_f32),
        ),
    )(x, w)


# ----------------------------------------------------------------------------
# Time-fused GRU layer kernel (intermediate layers): emits per-step hidden.
#   grid = (Bp//bm, T); hidden carry lives in VMEM scratch; wh stays resident.
# ----------------------------------------------------------------------------
def _gru_layer_kernel(gx_ref, h0_ref, wh_ref, hseq_ref, hfin_ref, h_sc):
    t = pl.program_id(1)
    Hp = h_sc.shape[-1]

    @pl.when(t == 0)
    def _():
        h_sc[...] = h0_ref[...].astype(jnp.float32)

    h = h_sc[...]                       # (bm, Hp) f32 carry (single load)
    gx = gx_ref[0]                      # (bm, 3*Hp) precomputed x-side gates
    gh = jnp.dot(h.astype(wh_ref.dtype), wh_ref[...],
                 preferred_element_type=jnp.float32)   # (bm, 2*Hp)

    r = jax.nn.sigmoid(gx[:, :Hp] + gh[:, :Hp])
    z = jax.nn.sigmoid(gx[:, Hp:2 * Hp] + gh[:, Hp:])
    n = jnp.tanh(gx[:, 2 * Hp:] + r * h)
    h_new = n + z * (h - n)             # == (1-z)*n + z*h

    h_sc[...] = h_new
    hseq_ref[0] = h_new.astype(hseq_ref.dtype)

    @pl.when(t == pl.num_programs(1) - 1)
    def _():
        hfin_ref[...] = h_new.astype(hfin_ref.dtype)


def _gru_layer_call(gx, h0, wh, *, bm):
    T, Bp, H3 = gx.shape
    Hp = H3 // 3
    n_f32 = (2 * Hp * 2 * Hp + 2 * bm * 3 * Hp + 2 * bm * Hp
             + 2 * bm * Hp + 2 * bm * Hp + bm * Hp + 12 * bm * Hp)
    return pl.pallas_call(
        _gru_layer_kernel,
        out_shape=(jax.ShapeDtypeStruct((T, Bp, Hp), jnp.float32),
                   jax.ShapeDtypeStruct((Bp, Hp), jnp.float32)),
        grid_spec=pltpu.PrefetchScalarGridSpec(
            num_scalar_prefetch=0,
            grid=(Bp // bm, T),
            in_specs=[
                pl.BlockSpec((1, bm, 3 * Hp), lambda i, t: (t, i, 0)),  # gx slab
                pl.BlockSpec((bm, Hp), lambda i, t: (i, 0)),            # h0
                pl.BlockSpec((Hp, 2 * Hp), lambda i, t: (0, 0)),        # resident wh
            ],
            out_specs=(pl.BlockSpec((1, bm, Hp), lambda i, t: (t, i, 0)),
                       pl.BlockSpec((bm, Hp), lambda i, t: (i, 0))),
            scratch_shapes=[pltpu.VMEM((bm, Hp), jnp.float32)],
        ),
        compiler_params=pltpu.CompilerParams(
            dimension_semantics=("parallel", "arbitrary"),
            vmem_limit_bytes=_vmem_limit(n_f32),
        ),
    )(gx, h0, wh)


# ----------------------------------------------------------------------------
# Time-fused GRU layer kernel with fused final FC (last layer): emits fc output
# per step directly, so the last layer's (T,Bp,Hp) hidden never hits HBM.
# ----------------------------------------------------------------------------
def _gru_layer_fc_kernel(gx_ref, h0_ref, wh_ref, fcw_ref, fcb_ref,
                         y_ref, hfin_ref, h_sc):
    t = pl.program_id(1)
    Hp = h_sc.shape[-1]

    @pl.when(t == 0)
    def _():
        h_sc[...] = h0_ref[...].astype(jnp.float32)

    h = h_sc[...]
    gx = gx_ref[0]
    gh = jnp.dot(h.astype(wh_ref.dtype), wh_ref[...],
                 preferred_element_type=jnp.float32)

    r = jax.nn.sigmoid(gx[:, :Hp] + gh[:, :Hp])
    z = jax.nn.sigmoid(gx[:, Hp:2 * Hp] + gh[:, Hp:])
    n = jnp.tanh(gx[:, 2 * Hp:] + r * h)
    h_new = n + z * (h - n)
    h_sc[...] = h_new

    # Fused final fc: (bm, Hp) @ (Hp, Op) + bias, while h_new is still in VMEM.
    y = jnp.dot(h_new.astype(fcw_ref.dtype), fcw_ref[...],
                preferred_element_type=jnp.float32) + fcb_ref[...]
    y_ref[0] = y.astype(y_ref.dtype)

    @pl.when(t == pl.num_programs(1) - 1)
    def _():
        hfin_ref[...] = h_new.astype(hfin_ref.dtype)


def _gru_layer_fc_call(gx, h0, wh, fc_w, fc_b, *, bm):
    T, Bp, H3 = gx.shape
    Hp = H3 // 3
    Op = fc_w.shape[1]
    n_f32 = (2 * Hp * 2 * Hp + 2 * (Hp * Op + Op)
             + 2 * bm * 3 * Hp + 2 * bm * Hp + 2 * bm * Op + 2 * bm * Hp
             + bm * Hp + 12 * bm * Hp + 2 * bm * Op)
    return pl.pallas_call(
        _gru_layer_fc_kernel,
        out_shape=(jax.ShapeDtypeStruct((T, Bp, Op), jnp.float32),
                   jax.ShapeDtypeStruct((Bp, Hp), jnp.float32)),
        grid_spec=pltpu.PrefetchScalarGridSpec(
            num_scalar_prefetch=0,
            grid=(Bp // bm, T),
            in_specs=[
                pl.BlockSpec((1, bm, 3 * Hp), lambda i, t: (t, i, 0)),  # gx slab
                pl.BlockSpec((bm, Hp), lambda i, t: (i, 0)),            # h0
                pl.BlockSpec((Hp, 2 * Hp), lambda i, t: (0, 0)),        # resident wh
                pl.BlockSpec((Hp, Op), lambda i, t: (0, 0)),            # resident fc_w
                pl.BlockSpec((1, Op), lambda i, t: (0, 0)),             # resident fc_b
            ],
            out_specs=(pl.BlockSpec((1, bm, Op), lambda i, t: (t, i, 0)),
                       pl.BlockSpec((bm, Hp), lambda i, t: (i, 0))),
            scratch_shapes=[pltpu.VMEM((bm, Hp), jnp.float32)],
        ),
        compiler_params=pltpu.CompilerParams(
            dimension_semantics=("parallel", "arbitrary"),
            vmem_limit_bytes=_vmem_limit(n_f32),
        ),
    )(gx, h0, wh, fc_w, fc_b)


# ----------------------------------------------------------------------------
# Host-side (one-time) parameter prep: transpose, drop unused 3rd h-gate,
# fuse x-side weights, pad to lane-dense (128-multiple) widths.
# ----------------------------------------------------------------------------
def _pad2(a, rows, cols):
    r, c = a.shape
    return jnp.pad(a, ((0, rows - r), (0, cols - c)))


def prepare_gru_layer_params(w_input, w_hidden, w_n, hidden_size, in_pad, dtype):
    """w_input:(3H,Din)  w_hidden:(3H,H)  w_n:(H,Din)  (PyTorch nn.Linear layout)."""
    H = hidden_size
    Hp = _round_up(max(H, LANE), LANE)

    wr_x = w_input[:H].T             # (Din, H)
    wz_x = w_input[H:2 * H].T        # (Din, H)
    wn_x = w_n.T                     # (Din, H)
    wr_h = w_hidden[:H].T            # (H, H)
    wz_h = w_hidden[H:2 * H].T       # (H, H)   (3rd gate of hidden_lin unused)

    wx = jnp.concatenate([_pad2(wr_x, in_pad, Hp),
                          _pad2(wz_x, in_pad, Hp),
                          _pad2(wn_x, in_pad, Hp)], axis=1)     # (in_pad, 3Hp)
    wh = jnp.concatenate([_pad2(wr_h, Hp, Hp),
                          _pad2(wz_h, Hp, Hp)], axis=1)          # (Hp, 2Hp)
    return wx.astype(dtype), wh.astype(dtype)


def prepare_maingru_params(layer_weights, fc_w, fc_b, hidden_size,
                           use_bf16_matmul=False):
    H = hidden_size
    Hp = _round_up(max(H, LANE), LANE)
    O = fc_w.shape[0]
    Op = _round_up(max(O, LANE), LANE)
    wdt = jnp.bfloat16 if use_bf16_matmul else jnp.float32

    gru_params = []
    for layer, (w_input, w_hidden, w_n) in enumerate(layer_weights):
        din = w_input.shape[1]
        in_pad = _round_up(max(din, LANE), LANE) if layer == 0 else Hp
        gru_params.append(
            prepare_gru_layer_params(w_input, w_hidden, w_n, H, in_pad, wdt))

    fc_w_p = _pad2(fc_w.T, Hp, Op).astype(wdt)               # (Hp, Op)
    fc_b_p = _pad2(fc_b.reshape(1, -1), 1, Op)                # (1, Op) f32
    return tuple(gru_params), fc_w_p, fc_b_p


# ----------------------------------------------------------------------------
# Full MAINGRU forward (GRU over time/layers -> dropout(identity) -> fc fused)
# ----------------------------------------------------------------------------
@functools.partial(jax.jit, static_argnames=("hidden_size", "output_size", "bm"))
def maingru_forward(x_seq, gru_params, fc_w_p, fc_b_p, state=None, *,
                    hidden_size, output_size, bm):
    T, B, Din = x_seq.shape
    H = hidden_size
    Hp = fc_w_p.shape[0]
    n_layers = len(gru_params)

    Bp = _round_up(max(B, SUBLANE), bm)
    Dp = gru_params[0][0].shape[0]       # padded layer-0 input width (lane-dense)

    # Pad input to (T, Bp, Dp); padded rows / cols are zero -> recurrence-inert.
    x_p = jnp.zeros((T, Bp, Dp), jnp.float32).at[:, :B, :Din].set(
        x_seq.astype(jnp.float32))

    if state is None:
        h0_all = jnp.zeros((n_layers, Bp, Hp), jnp.float32)
    else:
        h0_all = jnp.zeros((n_layers, Bp, Hp), jnp.float32).at[:, :B, :H].set(
            state.astype(jnp.float32))

    rows = T * Bp
    h_fins = []
    inp = x_p
    y_seq = None
    for layer in range(n_layers):
        wx, wh = gru_params[layer]
        K, N = wx.shape

        # Time-independent x-side GEMM for the whole sequence (one big matmul).
        bm_rows = _pick_row_tile(rows, K, N)
        rows_p = _round_up(rows, bm_rows)
        x_flat = inp.reshape(rows, K)
        if rows_p != rows:
            x_flat = jnp.pad(x_flat, ((0, rows_p - rows), (0, 0)))
        gx = _matmul_call(x_flat, wx, bm_rows=bm_rows)[:rows].reshape(T, Bp, N)

        if layer == n_layers - 1:
            # Last layer: fuse the final fc (+bias) into the recurrence kernel.
            # TODO(synk): nn.Dropout is identity at inference; training-mode RNG
            # masking between the GRU output and fc is not implemented.
            y_seq, h_fin = _gru_layer_fc_call(gx, h0_all[layer], wh,
                                              fc_w_p, fc_b_p, bm=bm)
        else:
            inp, h_fin = _gru_layer_call(gx, h0_all[layer], wh, bm=bm)
        h_fins.append(h_fin)

    h_final = jnp.stack(h_fins)[:, :B, :H]
    y = y_seq[:, :B, :output_size]
    return y, h_final


# ----------------------------------------------------------------------------
# Plain-JAX reference matching the PyTorch MAINGRU forward exactly.
# ----------------------------------------------------------------------------
def maingru_ref(x_seq, layer_weights, fc_w, fc_b, hidden_size, state=None):
    T, B, _ = x_seq.shape
    n_layers = len(layer_weights)
    if state is None:
        h = [jnp.zeros((B, hidden_size), x_seq.dtype) for _ in range(n_layers)]
    else:
        h = [state[l] for l in range(n_layers)]
    outs = []
    for t in range(T):
        inp = x_seq[t]
        for l in range(n_layers):
            w_input, w_hidden, w_n = layer_weights[l]
            gates = inp @ w_input.T + h[l] @ w_hidden.T
            r = jax.nn.sigmoid(gates[:, :hidden_size])
            z = jax.nn.sigmoid(gates[:, hidden_size:2 * hidden_size])
            n = jnp.tanh(inp @ w_n.T + r * h[l])
            h[l] = (1.0 - z) * n + z * h[l]
            inp = h[l]
        outs.append(h[-1])
    out = jnp.stack(outs)
    hfin = jnp.stack(h)
    y = out @ fc_w.T + fc_b
    return y, hfin


if __name__ == "__main__":
    # Small, deterministic test shapes consistent with the module.
    seq_len = 8
    batch = 4
    input_size = 16
    hidden_size = 32
    n_layers = 2
    output_size = 10

    key = jax.random.PRNGKey(0)
    keys = jax.random.split(key, 3 * n_layers + 3)

    x = jax.random.normal(keys[0], (seq_len, batch, input_size), dtype=jnp.float32)

    layer_weights = []
    for l in range(n_layers):
        din = input_size if l == 0 else hidden_size
        b_in = 1.0 / float(din) ** 0.5
        b_h = 1.0 / float(hidden_size) ** 0.5
        k0, k1, k2 = keys[1 + 3 * l], keys[2 + 3 * l], keys[3 + 3 * l]
        w_input = jax.random.uniform(k0, (3 * hidden_size, din),
                                     minval=-b_in, maxval=b_in, dtype=jnp.float32)
        w_hidden = jax.random.uniform(k1, (3 * hidden_size, hidden_size),
                                      minval=-b_h, maxval=b_h, dtype=jnp.float32)
        w_n = jax.random.uniform(k2, (hidden_size, din),
                                 minval=-b_in, maxval=b_in, dtype=jnp.float32)
        layer_weights.append((w_input, w_hidden, w_n))

    b_fc = 1.0 / float(hidden_size) ** 0.5
    fc_w = jax.random.uniform(keys[-2], (output_size, hidden_size),
                              minval=-b_fc, maxval=b_fc, dtype=jnp.float32)
    fc_b = jax.random.uniform(keys[-1], (output_size,),
                              minval=-b_fc, maxval=b_fc, dtype=jnp.float32)

    # One-time host-side weight prep (transpose / drop unused gate / fuse / pad).
    # use_bf16_matmul=True halves weight DMA + doubles MXU rate on v6e/v7x
    # (f32 accumulation & recurrence kept); left off here for tight f32 tolerances.
    gru_params, fc_w_p, fc_b_p = prepare_maingru_params(
        layer_weights, fc_w, fc_b, hidden_size, use_bf16_matmul=False)

    bm = pick_batch_tile(batch)

    y, h_final = maingru_forward(x, gru_params, fc_w_p, fc_b_p, None,
                                 hidden_size=hidden_size,
                                 output_size=output_size,
                                 bm=bm)
    jax.block_until_ready((y, h_final))

    y_ref, h_ref = maingru_ref(x, layer_weights, fc_w, fc_b, hidden_size)

    assert y.shape == (seq_len, batch, output_size)
    assert h_final.shape == (n_layers, batch, hidden_size)
    assert jnp.allclose(y, y_ref, atol=1e-4, rtol=1e-4), "fc output mismatch vs reference"
    assert jnp.allclose(h_final, h_ref, atol=1e-4, rtol=1e-4), "hidden state mismatch vs reference"

    print("KERNEL_OK")
</pallas_src>

<mosaic_0001>
module attributes {stable_mosaic.version = 11 : i64} {
  func.func @_matmul_kernel(%arg0: i32, %arg1: memref<64x128xf32, #tpu.memory_space<vmem>>, %arg2: memref<128x384xf32, #tpu.memory_space<vmem>>, %arg3: memref<64x384xf32, #tpu.memory_space<vmem>>) attributes {dimension_semantics = [#tpu.dimension_semantics<parallel>], iteration_bounds = array<i64: 1>, scalar_prefetch = 0 : i64, scratch_operands = 0 : i64, tpu.core_type = #tpu.core_type<tc>, window_params = [{transform_indices = @transform_0, window_bounds = array<i64: 64, 128>}, {pipeline_mode = #tpu.pipeline_mode<synchronous>, transform_indices = @transform_1, window_bounds = array<i64: 128, 384>}, {transform_indices = @transform_2, window_bounds = array<i64: 64, 384>}]} {
    %c0 = arith.constant 0 : index
    %c0_0 = arith.constant 0 : index
    %0 = vector.load %arg1[%c0, %c0_0] : memref<64x128xf32, #tpu.memory_space<vmem>>, vector<64x128xf32>
    %c0_1 = arith.constant 0 : index
    %c0_2 = arith.constant 0 : index
    %1 = vector.load %arg2[%c0_1, %c0_2] : memref<128x384xf32, #tpu.memory_space<vmem>>, vector<128x384xf32>
    %cst = arith.constant dense<0.000000e+00> : vector<64x384xf32>
    %2 = tpu.matmul %0, %1, %cst {dimension_numbers = #tpu.dot_dimension_numbers<[1], [0], [0], [1], [0, 0, 1, 1], [], []>} : vector<64x128xf32>, vector<128x384xf32>, vector<64x384xf32> -> vector<64x384xf32>
    %c0_3 = arith.constant 0 : index
    %c0_4 = arith.constant 0 : index
    %3 = vector.load %arg3[%c0_3, %c0_4] : memref<64x384xf32, #tpu.memory_space<vmem>>, vector<64x384xf32>
    tpu.vector_store %arg3[%c0_3, %c0_4], %2 {strides = array<i32>} : memref<64x384xf32, #tpu.memory_space<vmem>>, vector<64x384xf32>,
    return
  }
  func.func @transform_0(%arg0: i32) -> (i32, i32) {
    %c0_i32 = arith.constant 0 : i32
    %c0_i32_0 = arith.constant 0 : i32
    return %arg0, %c0_i32 : i32, i32
  }
  func.func @transform_1(%arg0: i32) -> (i32, i32) {
    %c0_i32 = arith.constant 0 : i32
    %c0_i32_0 = arith.constant 0 : i32
    %c0_i32_1 = arith.constant 0 : i32
    return %c0_i32, %c0_i32_0 : i32, i32
  }
  func.func @transform_2(%arg0: i32) -> (i32, i32) {
    %c0_i32 = arith.constant 0 : i32
    %c0_i32_0 = arith.constant 0 : i32
    return %arg0, %c0_i32 : i32, i32
  }
}

module attributes {stable_mosaic.version = 11 : i64} {
  func.func @_gru_layer_kernel(%arg0: i32, %arg1: i32, %arg2: memref<1x8x384xf32, #tpu.memory_space<vmem>>, %arg3: memref<8x128xf32, #tpu.memory_space<vmem>>, %arg4: memref<128x256xf32, #tpu.memory_space<vmem>>, %arg5: memref<1x8x128xf32, #tpu.memory_space<vmem>>, %arg6: memref<8x128xf32, #tpu.memory_space<vmem>>, %arg7: memref<8x128xf32, #tpu.memory_space<vmem>>) attributes {dimension_semantics = [#tpu.dimension_semantics<parallel>, #tpu.dimension_semantics<arbitrary>], iteration_bounds = array<i64: 1, 8>, scalar_prefetch = 0 : i64, scratch_operands = 1 : i64, tpu.core_type = #tpu.core_type<tc>, window_params = [{transform_indices = @transform_0, window_bounds = array<i64: 1, 8, 384>}, {transform_indices = @transform_1, window_bounds = array<i64: 8, 128>}, {pipeline_mode = #tpu.pipeline_mode<synchronous>, transform_indices = @transform_2, window_bounds = array<i64: 128, 256>}, {transform_indices = @transform_3, window_bounds = array<i64: 1, 8, 128>}, {transform_indices = @transform_4, window_bounds = array<i64: 8, 128>}]} {
    %c0_i32 = arith.constant 0 : i32
    %0 = arith.cmpi eq, %arg1, %c0_i32 : i32
    %1 = arith.extui %0 : i1 to i32
    %c0_i32_0 = arith.constant 0 : i32
    %2 = arith.cmpi ne, %1, %c0_i32_0 : i32
    scf.if %2 {
      %c0_15 = arith.constant 0 : index
      %c0_16 = arith.constant 0 : index
      %38 = vector.load %arg3[%c0_15, %c0_16] : memref<8x128xf32, #tpu.memory_space<vmem>>, vector<8x128xf32>
      %c0_17 = arith.constant 0 : index
      %c0_18 = arith.constant 0 : index
      %39 = vector.load %arg7[%c0_17, %c0_18] : memref<8x128xf32, #tpu.memory_space<vmem>>, vector<8x128xf32>
      tpu.vector_store %arg7[%c0_17, %c0_18], %38 {strides = array<i32>} : memref<8x128xf32, #tpu.memory_space<vmem>>, vector<8x128xf32>,
    } else {
    }
    %c0 = arith.constant 0 : index
    %c0_1 = arith.constant 0 : index
    %3 = vector.load %arg7[%c0, %c0_1] : memref<8x128xf32, #tpu.memory_space<vmem>>, vector<8x128xf32>
    %c0_2 = arith.constant 0 : index
    %c0_3 = arith.constant 0 : index
    %c0_4 = arith.constant 0 : index
    %4 = vector.load %arg2[%c0_2, %c0_3, %c0_4] : memref<1x8x384xf32, #tpu.memory_space<vmem>>, vector<1x8x384xf32>
    %5 = vector.shape_cast %4 : vector<1x8x384xf32> to vector<8x384xf32>
    %c0_5 = arith.constant 0 : index
    %c0_6 = arith.constant 0 : index
    %6 = vector.load %arg4[%c0_5, %c0_6] : memref<128x256xf32, #tpu.memory_space<vmem>>, vector<128x256xf32>
    %cst = arith.constant dense<0.000000e+00> : vector<8x256xf32>
    %7 = tpu.matmul %3, %6, %cst {dimension_numbers = #tpu.dot_dimension_numbers<[1], [0], [0], [1], [0, 0, 1, 1], [], []>} : vector<8x128xf32>, vector<128x256xf32>, vector<8x256xf32> -> vector<8x256xf32>
    %8 = vector.extract_strided_slice %5 {offsets = [0, 0], sizes = [8, 128], strides = [1, 1]} : vector<8x384xf32> to vector<8x128xf32>
    %9 = vector.extract_strided_slice %7 {offsets = [0, 0], sizes = [8, 128], strides = [1, 1]} : vector<8x256xf32> to vector<8x128xf32>
    %10 = arith.addf %8, %9 : vector<8x128xf32>
    %11 = arith.negf %10 : vector<8x128xf32>
    %12 = math.exp %11 : vector<8x128xf32>
    %cst_7 = arith.constant 1.000000e+00 : f32
    %13 = vector.broadcast %cst_7 : f32 to vector<8x128xf32>
    %14 = arith.addf %13, %12 : vector<8x128xf32>
    %15 = arith.divf %13, %14 : vector<8x128xf32>
    %16 = vector.extract_strided_slice %5 {offsets = [0, 128], sizes = [8, 128], strides = [1, 1]} : vector<8x384xf32> to vector<8x128xf32>
    %17 = vector.extract_strided_slice %7 {offsets = [0, 128], sizes = [8, 128], strides = [1, 1]} : vector<8x256xf32> to vector<8x128xf32>
    %18 = arith.addf %16, %17 : vector<8x128xf32>
    %19 = arith.negf %18 : vector<8x128xf32>
    %20 = math.exp %19 : vector<8x128xf32>
    %cst_8 = arith.constant 1.000000e+00 : f32
    %21 = vector.broadcast %cst_8 : f32 to vector<8x128xf32>
    %22 = arith.addf %21, %20 : vector<8x128xf32>
    %23 = arith.divf %21, %22 : vector<8x128xf32>
    %24 = vector.extract_strided_slice %5 {offsets = [0, 256], sizes = [8, 128], strides = [1, 1]} : vector<8x384xf32> to vector<8x128xf32>
    %25 = arith.mulf %15, %3 : vector<8x128xf32>
    %26 = arith.addf %24, %25 : vector<8x128xf32>
    %27 = math.tanh %26 : vector<8x128xf32>
    %28 = arith.subf %3, %27 : vector<8x128xf32>
    %29 = arith.mulf %23, %28 : vector<8x128xf32>
    %30 = arith.addf %27, %29 : vector<8x128xf32>
    %c0_9 = arith.constant 0 : index
    %c0_10 = arith.constant 0 : index
    %31 = vector.load %arg7[%c0_9, %c0_10] : memref<8x128xf32, #tpu.memory_space<vmem>>, vector<8x128xf32>
    tpu.vector_store %arg7[%c0_9, %c0_10], %30 {strides = array<i32>} : memref<8x128xf32, #tpu.memory_space<vmem>>, vector<8x128xf32>,
    %c0_11 = arith.constant 0 : index
    %c0_12 = arith.constant 0 : index
    %c0_13 = arith.constant 0 : index
    %32 = vector.load %arg5[%c0_11, %c0_12, %c0_13] : memref<1x8x128xf32, #tpu.memory_space<vmem>>, vector<1x8x128xf32>
    %33 = vector.shape_cast %32 : vector<1x8x128xf32> to vector<8x128xf32>
    %34 = vector.shape_cast %30 : vector<8x128xf32> to vector<1x8x128xf32>
    tpu.vector_store %arg5[%c0_11, %c0_12, %c0_13], %34 {strides = array<i32>} : memref<1x8x128xf32, #tpu.memory_space<vmem>>, vector<1x8x128xf32>,
    %c7_i32 = arith.constant 7 : i32
    %35 = arith.cmpi eq, %arg1, %c7_i32 : i32
    %36 = arith.extui %35 : i1 to i32
    %c0_i32_14 = arith.constant 0 : i32
    %37 = arith.cmpi ne, %36, %c0_i32_14 : i32
    scf.if %37 {
      %c0_15 = arith.constant 0 : index
      %c0_16 = arith.constant 0 : index
      %38 = vector.load %arg6[%c0_15, %c0_16] : memref<8x128xf32, #tpu.memory_space<vmem>>, vector<8x128xf32>
      tpu.vector_store %arg6[%c0_15, %c0_16], %30 {strides = array<i32>} : memref<8x128xf32, #tpu.memory_space<vmem>>, vector<8x128xf32>,
    } else {
    }
    return
  }
  func.func @transform_0(%arg0: i32, %arg1: i32) -> (i32, i32, i32) {
    %c0_i32 = arith.constant 0 : i32
    %c0_i32_0 = arith.constant 0 : i32
    return %arg1, %arg0, %c0_i32 : i32, i32, i32
  }
  func.func @transform_1(%arg0: i32, %arg1: i32) -> (i32, i32) {
    %c0_i32 = arith.constant 0 : i32
    %c0_i32_0 = arith.constant 0 : i32
    return %arg0, %c0_i32 : i32, i32
  }
  func.func @transform_2(%arg0: i32, %arg1: i32) -> (i32, i32) {
    %c0_i32 = arith.constant 0 : i32
    %c0_i32_0 = arith.constant 0 : i32
    %c0_i32_1 = arith.constant 0 : i32
    return %c0_i32, %c0_i32_0 : i32, i32
  }
  func.func @transform_3(%arg0: i32, %arg1: i32) -> (i32, i32, i32) {
    %c0_i32 = arith.constant 0 : i32
    %c0_i32_0 = arith.constant 0 : i32
    return %arg1, %arg0, %c0_i32 : i32, i32, i32
  }
  func.func @transform_4(%arg0: i32, %arg1: i32) -> (i32, i32) {
    %c0_i32 = arith.constant 0 : i32
    %c0_i32_0 = arith.constant 0 : i32
    return %arg0, %c0_i32 : i32, i32
  }
}

module attributes {stable_mosaic.version = 11 : i64} {
  func.func @_gru_layer_fc_kernel(%arg0: i32, %arg1: i32, %arg2: memref<1x8x384xf32, #tpu.memory_space<vmem>>, %arg3: memref<8x128xf32, #tpu.memory_space<vmem>>, %arg4: memref<128x256xf32, #tpu.memory_space<vmem>>, %arg5: memref<128x128xf32, #tpu.memory_space<vmem>>, %arg6: memref<1x128xf32, #tpu.memory_space<vmem>>, %arg7: memref<1x8x128xf32, #tpu.memory_space<vmem>>, %arg8: memref<8x128xf32, #tpu.memory_space<vmem>>, %arg9: memref<8x128xf32, #tpu.memory_space<vmem>>) attributes {dimension_semantics = [#tpu.dimension_semantics<parallel>, #tpu.dimension_semantics<arbitrary>], iteration_bounds = array<i64: 1, 8>, scalar_prefetch = 0 : i64, scratch_operands = 1 : i64, tpu.core_type = #tpu.core_type<tc>, window_params = [{transform_indices = @transform_0, window_bounds = array<i64: 1, 8, 384>}, {transform_indices = @transform_1, window_bounds = array<i64: 8, 128>}, {pipeline_mode = #tpu.pipeline_mode<synchronous>, transform_indices = @transform_2, window_bounds = array<i64: 128, 256>}, {pipeline_mode = #tpu.pipeline_mode<synchronous>, transform_indices = @transform_3, window_bounds = array<i64: 128, 128>}, {pipeline_mode = #tpu.pipeline_mode<synchronous>, transform_indices = @transform_4, window_bounds = array<i64: 1, 128>}, {transform_indices = @transform_5, window_bounds = array<i64: 1, 8, 128>}, {transform_indices = @transform_6, window_bounds = array<i64: 8, 128>}]} {
    %c0_i32 = arith.constant 0 : i32
    %0 = arith.cmpi eq, %arg1, %c0_i32 : i32
    %1 = arith.extui %0 : i1 to i32
    %c0_i32_0 = arith.constant 0 : i32
    %2 = arith.cmpi ne, %1, %c0_i32_0 : i32
    scf.if %2 {
      %c0_20 = arith.constant 0 : index
      %c0_21 = arith.constant 0 : index
      %43 = vector.load %arg3[%c0_20, %c0_21] : memref<8x128xf32, #tpu.memory_space<vmem>>, vector<8x128xf32>
      %c0_22 = arith.constant 0 : index
      %c0_23 = arith.constant 0 : index
      %44 = vector.load %arg9[%c0_22, %c0_23] : memref<8x128xf32, #tpu.memory_space<vmem>>, vector<8x128xf32>
      tpu.vector_store %arg9[%c0_22, %c0_23], %43 {strides = array<i32>} : memref<8x128xf32, #tpu.memory_space<vmem>>, vector<8x128xf32>,
    } else {
    }
    %c0 = arith.constant 0 : index
    %c0_1 = arith.constant 0 : index
    %3 = vector.load %arg9[%c0, %c0_1] : memref<8x128xf32, #tpu.memory_space<vmem>>, vector<8x128xf32>
    %c0_2 = arith.constant 0 : index
    %c0_3 = arith.constant 0 : index
    %c0_4 = arith.constant 0 : index
    %4 = vector.load %arg2[%c0_2, %c0_3, %c0_4] : memref<1x8x384xf32, #tpu.memory_space<vmem>>, vector<1x8x384xf32>
    %5 = vector.shape_cast %4 : vector<1x8x384xf32> to vector<8x384xf32>
    %c0_5 = arith.constant 0 : index
    %c0_6 = arith.constant 0 : index
    %6 = vector.load %arg4[%c0_5, %c0_6] : memref<128x256xf32, #tpu.memory_space<vmem>>, vector<128x256xf32>
    %cst = arith.constant dense<0.000000e+00> : vector<8x256xf32>
    %7 = tpu.matmul %3, %6, %cst {dimension_numbers = #tpu.dot_dimension_numbers<[1], [0], [0], [1], [0, 0, 1, 1], [], []>} : vector<8x128xf32>, vector<128x256xf32>, vector<8x256xf32> -> vector<8x256xf32>
    %8 = vector.extract_strided_slice %5 {offsets = [0, 0], sizes = [8, 128], strides = [1, 1]} : vector<8x384xf32> to vector<8x128xf32>
    %9 = vector.extract_strided_slice %7 {offsets = [0, 0], sizes = [8, 128], strides = [1, 1]} : vector<8x256xf32> to vector<8x128xf32>
    %10 = arith.addf %8, %9 : vector<8x128xf32>
    %11 = arith.negf %10 : vector<8x128xf32>
    %12 = math.exp %11 : vector<8x128xf32>
    %cst_7 = arith.constant 1.000000e+00 : f32
    %13 = vector.broadcast %cst_7 : f32 to vector<8x128xf32>
    %14 = arith.addf %13, %12 : vector<8x128xf32>
    %15 = arith.divf %13, %14 : vector<8x128xf32>
    %16 = vector.extract_strided_slice %5 {offsets = [0, 128], sizes = [8, 128], strides = [1, 1]} : vector<8x384xf32> to vector<8x128xf32>
    %17 = vector.extract_strided_slice %7 {offsets = [0, 128], sizes = [8, 128], strides = [1, 1]} : vector<8x256xf32> to vector<8x128xf32>
    %18 = arith.addf %16, %17 : vector<8x128xf32>
    %19 = arith.negf %18 : vector<8x128xf32>
    %20 = math.exp %19 : vector<8x128xf32>
    %cst_8 = arith.constant 1.000000e+00 : f32
    %21 = vector.broadcast %cst_8 : f32 to vector<8x128xf32>
    %22 = arith.addf %21, %20 : vector<8x128xf32>
    %23 = arith.divf %21, %22 : vector<8x128xf32>
    %24 = vector.extract_strided_slice %5 {offsets = [0, 256], sizes = [8, 128], strides = [1, 1]} : vector<8x384xf32> to vector<8x128xf32>
    %25 = arith.mulf %15, %3 : vector<8x128xf32>
    %26 = arith.addf %24, %25 : vector<8x128xf32>
    %27 = math.tanh %26 : vector<8x128xf32>
    %28 = arith.subf %3, %27 : vector<8x128xf32>
    %29 = arith.mulf %23, %28 : vector<8x128xf32>
    %30 = arith.addf %27, %29 : vector<8x128xf32>
    %c0_9 = arith.constant 0 : index
    %c0_10 = arith.constant 0 : index
    %31 = vector.load %arg9[%c0_9, %c0_10] : memref<8x128xf32, #tpu.memory_space<vmem>>, vector<8x128xf32>
    tpu.vector_store %arg9[%c0_9, %c0_10], %30 {strides = array<i32>} : memref<8x128xf32, #tpu.memory_space<vmem>>, vector<8x128xf32>,
    %c0_11 = arith.constant 0 : index
    %c0_12 = arith.constant 0 : index
    %32 = vector.load %arg5[%c0_11, %c0_12] : memref<128x128xf32, #tpu.memory_space<vmem>>, vector<128x128xf32>
    %cst_13 = arith.constant dense<0.000000e+00> : vector<8x128xf32>
    %33 = tpu.matmul %30, %32, %cst_13 {dimension_numbers = #tpu.dot_dimension_numbers<[1], [0], [0], [1], [0, 0, 1, 1], [], []>} : vector<8x128xf32>, vector<128x128xf32>, vector<8x128xf32> -> vector<8x128xf32>
    %c0_14 = arith.constant 0 : index
    %c0_15 = arith.constant 0 : index
    %34 = vector.load %arg6[%c0_14, %c0_15] : memref<1x128xf32, #tpu.memory_space<vmem>>, vector<1x128xf32>
    %35 = vector.broadcast %34 : vector<1x128xf32> to vector<8x128xf32>
    %36 = arith.addf %33, %35 : vector<8x128xf32>
    %c0_16 = arith.constant 0 : index
    %c0_17 = arith.constant 0 : index
    %c0_18 = arith.constant 0 : index
    %37 = vector.load %arg7[%c0_16, %c0_17, %c0_18] : memref<1x8x128xf32, #tpu.memory_space<vmem>>, vector<1x8x128xf32>
    %38 = vector.shape_cast %37 : vector<1x8x128xf32> to vector<8x128xf32>
    %39 = vector.shape_cast %36 : vector<8x128xf32> to vector<1x8x128xf32>
    tpu.vector_store %arg7[%c0_16, %c0_17, %c0_18], %39 {strides = array<i32>} : memref<1x8x128xf32, #tpu.memory_space<vmem>>, vector<1x8x128xf32>,
    %c7_i32 = arith.constant 7 : i32
    %40 = arith.cmpi eq, %arg1, %c7_i32 : i32
    %41 = arith.extui %40 : i1 to i32
    %c0_i32_19 = arith.constant 0 : i32
    %42 = arith.cmpi ne, %41, %c0_i32_19 : i32
    scf.if %42 {
      %c0_20 = arith.constant 0 : index
      %c0_21 = arith.constant 0 : index
      %43 = vector.load %arg8[%c0_20, %c0_21] : memref<8x128xf32, #tpu.memory_space<vmem>>, vector<8x128xf32>
      tpu.vector_store %arg8[%c0_20, %c0_21], %30 {strides = array<i32>} : memref<8x128xf32, #tpu.memory_space<vmem>>, vector<8x128xf32>,
    } else {
    }
    return
  }
  func.func @transform_0(%arg0: i32, %arg1: i32) -> (i32, i32, i32) {
    %c0_i32 = arith.constant 0 : i32
    %c0_i32_0 = arith.constant 0 : i32
    return %arg1, %arg0, %c0_i32 : i32, i32, i32
  }
  func.func @transform_1(%arg0: i32, %arg1: i32) -> (i32, i32) {
    %c0_i32 = arith.constant 0 : i32
    %c0_i32_0 = arith.constant 0 : i32
    return %arg0, %c0_i32 : i32, i32
  }
  func.func @transform_2(%arg0: i32, %arg1: i32) -> (i32, i32) {
    %c0_i32 = arith.constant 0 : i32
    %c0_i32_0 = arith.constant 0 : i32
    %c0_i32_1 = arith.constant 0 : i32
    return %c0_i32, %c0_i32_0 : i32, i32
  }
  func.func @transform_3(%arg0: i32, %arg1: i32) -> (i32, i32) {
    %c0_i32 = arith.constant 0 : i32
    %c0_i32_0 = arith.constant 0 : i32
    %c0_i32_1 = arith.constant 0 : i32
    return %c0_i32, %c0_i32_0 : i32, i32
  }
  func.func @transform_4(%arg0: i32, %arg1: i32) -> (i32, i32) {
    %c0_i32 = arith.constant 0 : i32
    %c0_i32_0 = arith.constant 0 : i32
    %c0_i32_1 = arith.constant 0 : i32
    return %c0_i32, %c0_i32_0 : i32, i32
  }
  func.func @transform_5(%arg0: i32, %arg1: i32) -> (i32, i32, i32) {
    %c0_i32 = arith.constant 0 : i32
    %c0_i32_0 = arith.constant 0 : i32
    return %arg1, %arg0, %c0_i32 : i32, i32, i32
  }
  func.func @transform_6(%arg0: i32, %arg1: i32) -> (i32, i32) {
    %c0_i32 = arith.constant 0 : i32
    %c0_i32_0 = arith.constant 0 : i32
    return %arg0, %c0_i32 : i32, i32
  }
}

</mosaic_0001>

<llo_original>
// kernel: maingru_forward.5
$region0: #{maingru_forward.5}
  #allocation0 [shape = 'u32[]', space=smem, size = 0x4, offset = 0x4, fixed_abs, tag = 'smem constant byte address 0x4 - core index']
  #allocation1 [shape = 'u32[72,128]{1,0:T(1,128)}', space=vmem, size = 0x9000, scoped, tag = 'internal scratch']
  #allocation2 [shape = 'f32[8,128]{1,0:T(8,128)}', space=vmem, size = 0x1000, scoped, tag = 'scratch operand']
  %s0 = inlined_call_operand.vmem [shape: f32[8,8,384], index: 0, kind: input, shape index: {}]
  %s1 = inlined_call_operand.vmem [shape: f32[8,128], index: 1, kind: input, shape index: {}]
  %s2 = inlined_call_operand.hbm [shape: f32[128,256], index: 2, kind: input, shape index: {}]
  %s3 = inlined_call_operand.vmem [shape: f32[8,8,128], index: 3, kind: output, shape index: {0}]
  %s4 = inlined_call_operand.vmem [shape: f32[8,128], index: 4, kind: output, shape index: {1}]
  %5 = xla_tuple %s3, %s4
  %s6 = sld [smem:[#allocation0]]
  $region65: #{maingru_forward.5} parent=0
    _
  %s8 = ssub.s32 1, %s6
  %s9 = scalar_select 0, %s8, %s6
  $region1: #{maingru_forward.5} parent=0
    #allocation3 [shape = 'u8[131072]{0}', space=vmem, size = 0x20000, scoped, tag = 'input window, operand 2, single buffered']
    #allocation4 [shape = 's32[2]{0}', space=sflag, size = 0x8, scoped, tag = 'scoped memory for maingru_forward.5']
    %10 = vsyncpa [#allocation4], 0
    loop: start=0, step=1, limit=10
    $region2: #{maingru_forward.5} parent=1 // loop_pre_header
      _
    $region3: #{maingru_forward.5} parent=1 // loop_header
      %s12 = sphi 0, %s16
      %p13 = scmp.ge.s32.totalorder %s12, 10
      %s19 = sphi 0, %s31
      %s20 = sphi 0, %s27
      %s21 = sphi 0, %s19
      %s22 = sphi 0, %s20
      %s23 = sphi 0, %s21
      %s24 = sphi 0, %s22
      %s36 = sphi 0, %s38
      %s39 = sphi 0, %s36
      %s40 = sphi 0, %s39
      %s56 = sphi 0, %s40
      %s62 = sphi 0, %s64
      %s65 = sphi 0, %s62
      %s66 = sphi 0, %s65
      %s82 = sphi 0, %s66
      %s86 = sphi 0, %s86
      %s88 = sphi 0, %s86
      %s89 = sphi 0, %s88
      %s103 = sphi 0, %s89
      %s111 = sphi 0, %s113
      %s114 = sphi 0, %s111
      %s115 = sphi 0, %s114
      %s131 = sphi 0, %s115
      %s137 = sphi 0, %s139
      %s140 = sphi 0, %s137
      %s141 = sphi 0, %s140
      %s157 = sphi 0, %s141
    $region4: #{maingru_forward.5} parent=1 // loop_header_branch
      %15 = sbr.rel (%p13) target = $region8
    $region5: #{maingru_forward.5} parent=1 // loop_body
      %s17 = ssub.s32 %s12, 1
      %s18 = ssub.s32 %s12, 2
      %s25 = sadd.s32 1, %s20
      %p26 = scmp.ge.s32.totalorder %s25, 8
      %s27 = scalar_select %p26, 0, %s25
      %s28 = sadd.s32 1, %s19
      %s29 = scalar_select %p26, %s28, %s19
      %p30 = scmp.ge.s32.totalorder %s29, 1
      %s31 = scalar_select %p30, 0, %s29
      %s32 = ssub.s32 %s20, %s27
      %s33 = ssub.s32 %s19, %s31
      %s34 = sor.u32 %s32, %s33
      %p35 = scmp.eq.s32.totalorder %s34, 0
      %s37 = sadd.s32 %s36, 1
      %s38 = scalar_select %p35, %s36, %s37
      %p41 = pneg %p35
      %p42 = scmp.eq.s32.totalorder %s12, 7
      %p43 = por %p41, %p42
      %p44 = scmp.ne.s32.totalorder %s36, %s39
      %p45 = scmp.eq.s32.totalorder %s12, 0
      %p46 = por %p44, %p45
      %p47 = scmp.ne.s32.totalorder %s36, %s39
      %p48 = scmp.eq.s32.totalorder %s17, 7
      %p49 = por %p47, %p48
      %p50 = scmp.ne.s32.totalorder %s39, %s40
      %p51 = scmp.eq.s32.totalorder %s17, 0
      %p52 = por %p50, %p51
      %p53 = scmp.ne.s32.totalorder %s39, %s40
      %p54 = scmp.eq.s32.totalorder %s18, 7
      %p55 = por %p53, %p54
      %p57 = scmp.ne.s32.totalorder %s40, %s56
      %p58 = scmp.eq.s32.totalorder %s18, 0
      %p59 = por %p57, %p58
      %s60 = ssub.s32 %s19, %s31
      %p61 = scmp.eq.s32.totalorder %s60, 0
      %s63 = sadd.s32 %s62, 1
      %s64 = scalar_select %p61, %s62, %s63
      %p67 = pneg %p61
      %p68 = scmp.eq.s32.totalorder %s12, 7
      %p69 = por %p67, %p68
      %p70 = scmp.ne.s32.totalorder %s62, %s65
      %p71 = scmp.eq.s32.totalorder %s12, 0
      %p72 = por %p70, %p71
      %p73 = scmp.ne.s32.totalorder %s62, %s65
      %p74 = scmp.eq.s32.totalorder %s17, 7
      %p75 = por %p73, %p74
      %p76 = scmp.ne.s32.totalorder %s65, %s66
      %p77 = scmp.eq.s32.totalorder %s17, 0
      %p78 = por %p76, %p77
      %p79 = scmp.ne.s32.totalorder %s65, %s66
      %p80 = scmp.eq.s32.totalorder %s18, 7
      %p81 = por %p79, %p80
      %p83 = scmp.ne.s32.totalorder %s66, %s82
      %p84 = scmp.eq.s32.totalorder %s18, 0
      %p85 = por %p83, %p84
      %s87 = sadd.s32 %s86, 1
      %p90 = scmp.eq.s32.totalorder %s12, 7
      %p91 = scmp.ne.s32.totalorder %s86, %s88
      %p92 = scmp.eq.s32.totalorder %s12, 0
      %p93 = por %p91, %p92
      %p94 = scmp.ne.s32.totalorder %s86, %s88
      %p95 = scmp.eq.s32.totalorder %s17, 7
      %p96 = por %p94, %p95
      %p97 = scmp.ne.s32.totalorder %s88, %s89
      %p98 = scmp.eq.s32.totalorder %s17, 0
      %p99 = por %p97, %p98
      %p100 = scmp.ne.s32.totalorder %s88, %s89
      %p101 = scmp.eq.s32.totalorder %s18, 7
      %p102 = por %p100, %p101
      %p104 = scmp.ne.s32.totalorder %s89, %s103
      %p105 = scmp.eq.s32.totalorder %s18, 0
      %p106 = por %p104, %p105
      %s107 = ssub.s32 %s20, %s27
      %s108 = ssub.s32 %s19, %s31
      %s109 = sor.u32 %s107, %s108
      %p110 = scmp.eq.s32.totalorder %s109, 0
      %s112 = sadd.s32 %s111, 1
      %s113 = scalar_select %p110, %s111, %s112
      %p116 = pneg %p110
      %p117 = scmp.eq.s32.totalorder %s12, 7
      %p118 = por %p116, %p117
      %p119 = scmp.ne.s32.totalorder %s111, %s114
      %p120 = scmp.eq.s32.totalorder %s12, 0
      %p121 = por %p119, %p120
      %p122 = scmp.ne.s32.totalorder %s111, %s114
      %p123 = scmp.eq.s32.totalorder %s17, 7
      %p124 = por %p122, %p123
      %p125 = scmp.ne.s32.totalorder %s114, %s115
      %p126 = scmp.eq.s32.totalorder %s17, 0
      %p127 = por %p125, %p126
      %p128 = scmp.ne.s32.totalorder %s114, %s115
      %p129 = scmp.eq.s32.totalorder %s18, 7
      %p130 = por %p128, %p129
      %p132 = scmp.ne.s32.totalorder %s115, %s131
      %p133 = scmp.eq.s32.totalorder %s18, 0
      %p134 = por %p132, %p133
      %s135 = ssub.s32 %s19, %s31
      %p136 = scmp.eq.s32.totalorder %s135, 0
      %s138 = sadd.s32 %s137, 1
      %s139 = scalar_select %p136, %s137, %s138
      %p142 = pneg %p136
      %p143 = scmp.eq.s32.totalorder %s12, 7
      %p144 = por %p142, %p143
      %p145 = scmp.ne.s32.totalorder %s137, %s140
      %p146 = scmp.eq.s32.totalorder %s12, 0
      %p147 = por %p145, %p146
      %p148 = scmp.ne.s32.totalorder %s137, %s140
      %p149 = scmp.eq.s32.totalorder %s17, 7
      %p150 = por %p148, %p149
      %p151 = scmp.ne.s32.totalorder %s140, %s141
      %p152 = scmp.eq.s32.totalorder %s17, 0
      %p153 = por %p151, %p152
      %p154 = scmp.ne.s32.totalorder %s140, %s141
      %p155 = scmp.eq.s32.totalorder %s18, 7
      %p156 = por %p154, %p155
      %p158 = scmp.ne.s32.totalorder %s141, %s157
      %p159 = scmp.eq.s32.totalorder %s18, 0
      %p160 = por %p158, %p159
      %p161 = scmp.le.s32.totalorder 1, %s12
      %p162 = scmp.lt.s32.totalorder %s12, 9
      %p163 = pnand %p161, %p162
      %p164 = pneg %p163
      // Predicated region
      $region9: #{maingru_forward.5} parent=5 // pred_check
        _
      $region10: #{maingru_forward.5} parent=5 // pred_check_branch
        %166 = sbr.rel (%p163) target = $region12
      $region11: #{maingru_forward.5} parent=5 // pred_region
        %s167 = ssub.s32 %s12, 1
        // Predicated region
        $region13: #{maingru_forward.5} parent=11 // pred_check
          %p168 = pneg %p78
        $region14: #{maingru_forward.5} parent=11 // pred_check_branch
          %170 = sbr.rel (%p168) target = $region16
        $region15: #{maingru_forward.5} parent=11 // pred_region
          %p171 = scmp.lt.s32.totalorder %s21, 0
          %s172 = scalar_select %p171, %s21, 0
          %s173 = smul.addr %s172, 8
          %s174 = scalar_lea.vmem %s1, %s173
        $region16: #{maingru_forward.5} parent=11 // pred_fallthru
          _
        // Predicated region
        $region17: #{maingru_forward.5} parent=11 // pred_check
          %p175 = pneg %p99
        $region18: #{maingru_forward.5} parent=11 // pred_check_branch
          %177 = sbr.rel (%p175) target = $region20
        $region19: #{maingru_forward.5} parent=11 // pred_region
          %179 = vsyncadd [#allocation4], 0
          %s180 = sshll.u32 %s2, 4
          %s181 = int_to_ptr.hbm [resolvable:$true] %s180
          %s182 = sshll.u32 [#allocation3], 4
          %s183 = int_to_ptr.vmem [resolvable:$true] %s182
          %188 = dma.hbm_to_vmem [thread:$0]  %s181, 4096, %s183, [#allocation4], 256, 256, 16
        $region20: #{maingru_forward.5} parent=11 // pred_fallthru
          _
      $region12: #{maingru_forward.5} parent=5 // pred_fallthru
        _
      %p189 = scmp.lt.s32.totalorder %s12, 8
      // Predicated region
      $region21: #{maingru_forward.5} parent=5 // pred_check
        %p190 = pneg %p189
      $region22: #{maingru_forward.5} parent=5 // pred_check_branch
        %192 = sbr.rel (%p190) target = $region24
      $region23: #{maingru_forward.5} parent=5 // pred_region
        // Predicated region
        $region25: #{maingru_forward.5} parent=23 // pred_check
          %p193 = pneg %p46
        $region26: #{maingru_forward.5} parent=23 // pred_check_branch
          %195 = sbr.rel (%p193) target = $region28
        $region27: #{maingru_forward.5} parent=23 // pred_region
          %p196 = scmp.lt.s32.totalorder %s20, 7
          %s197 = scalar_select %p196, %s20, 7
          %p198 = scmp.lt.s32.totalorder %s19, 0
          %s199 = scalar_select %p198, %s19, 0
          %s200 = smul.addr %s199, 3
          %s201 = smul.addr %s197, 3
          %s202 = sadd.s32 %s200, %s201
          %s203 = smul.addr %s202, 8
          %s204 = scalar_lea.vmem %s0, %s203
        $region28: #{maingru_forward.5} parent=23 // pred_fallthru
          _
      $region24: #{maingru_forward.5} parent=5 // pred_fallthru
        _
      %p205 = scmp.le.s32.totalorder 1, %s12
      %p206 = scmp.lt.s32.totalorder %s12, 9
      %p207 = pnand %p205, %p206
      %p208 = pneg %p207
      // Predicated region
      $region29: #{maingru_forward.5} parent=5 // pred_check
        _
      $region30: #{maingru_forward.5} parent=5 // pred_check_branch
        %210 = sbr.rel (%p207) target = $region32
      $region31: #{maingru_forward.5} parent=5 // pred_region
        %s211 = ssub.s32 %s12, 1
        // Predicated region
        $region33: #{maingru_forward.5} parent=31 // pred_check
          %p212 = pneg %p99
        $region34: #{maingru_forward.5} parent=31 // pred_check_branch
          %214 = sbr.rel (%p212) target = $region36
        $region35: #{maingru_forward.5} parent=31 // pred_region
          %216 = dma.done [#allocation4], 4096
        $region36: #{maingru_forward.5} parent=31 // pred_fallthru
          _
        %p217 = scmp.lt.s32.totalorder %s22, 7
        %s218 = scalar_select %p217, %s22, 7
        %p219 = scmp.lt.s32.totalorder %s21, 0
        %s220 = scalar_select %p219, %s21, 0
        %s221 = smul.addr %s220, 3
        %s222 = smul.addr %s218, 3
        %s223 = sadd.s32 %s221, %s222
        %s224 = smul.addr %s223, 8
        %s225 = scalar_lea.vmem %s0, %s224
        %p226 = pneg %p52
        %p227 = pneg %p49
        %p228 = scmp.lt.s32.totalorder %s21, 0
        %s229 = scalar_select %p228, %s21, 0
        %s230 = smul.addr %s229, 8
        %s231 = scalar_lea.vmem %s1, %s230
        %p232 = pneg %p78
        %p233 = pneg %p75
        %p234 = pneg %p99
        %p235 = pneg %p96
        %p236 = pneg %p127
        %p237 = pneg %p124
        %p238 = scmp.lt.s32.totalorder %s22, 7
        %s239 = scalar_select %p238, %s22, 7
        %p240 = scmp.lt.s32.totalorder %s21, 0
        %s241 = scalar_select %p240, %s21, 0
        %s242 = sadd.s32 %s241, %s239
        %s243 = smul.addr %s242, 8
        %s244 = scalar_lea.vmem %s3, %s243
        %p245 = pneg %p153
        %p246 = pneg %p150
        %p247 = scmp.lt.s32.totalorder %s21, 0
        %s248 = scalar_select %p247, %s21, 0
        %s249 = smul.addr %s248, 8
        %s250 = scalar_lea.vmem %s4, %s249
        %p251 = scmp.lt.s32.totalorder %s22, 7
        %s252 = scalar_select %p251, %s22, 7
        %p253 = scmp.lt.s32.totalorder %s21, 0
        %s254 = scalar_select %p253, %s21, 0
        %s255 = smul.addr %s254, 3
        %s256 = smul.addr %s252, 3
        %s257 = sadd.s32 %s255, %s256
        %s258 = smul.addr %s257, 8
        %s259 = scalar_lea.vmem %s0, %s258
        %p260 = scmp.lt.s32.totalorder %s21, 0
        %s261 = scalar_select %p260, %s21, 0
        %s262 = smul.addr %s261, 8
        %s263 = scalar_lea.vmem %s1, %s262
        %p264 = scmp.lt.s32.totalorder %s22, 7
        %s265 = scalar_select %p264, %s22, 7
        %p266 = scmp.lt.s32.totalorder %s21, 0
        %s267 = scalar_select %p266, %s21, 0
        %s268 = sadd.s32 %s267, %s265
        %s269 = smul.addr %s268, 8
        %s270 = scalar_lea.vmem %s3, %s269
        %p271 = scmp.lt.s32.totalorder %s21, 0
        %s272 = scalar_select %p271, %s21, 0
        %s273 = smul.addr %s272, 8
        %s274 = scalar_lea.vmem %s4, %s273
        %p275 = scmp.eq.s32.totalorder %s22, 0
        // Predicated region
        $region37: #{maingru_forward.5} parent=31 // pred_check
          %p276 = pneg %p275
        $region38: #{maingru_forward.5} parent=31 // pred_check_branch
          %278 = sbr.rel (%p276) target = $region40
        $region39: #{maingru_forward.5} parent=31 // pred_region
          %v279 = vld [vmem:[%s263] sm:$0xff]
          %280 = vst [vmem:[#allocation2] sm:$0xff] %v279
        $region40: #{maingru_forward.5} parent=31 // pred_fallthru
          _
        %v281 = vld [vmem:[#allocation2] sm:$0xff]
        %v282 = vld [vmem:[%s259] sm:$0xff]
        %v283 = vld [vmem:[%s259 + $0x8] sm:$0xff]
        %v284 = vld [vmem:[%s259 + $0x10] sm:$0xff]
        %v285 = vld [vmem:[#allocation3] sm:$0xff]
        %v286 = vld [vmem:[#allocation3 + $0x8] sm:$0xff]
        %v287 = vld [vmem:[#allocation3 + $0x10] sm:$0xff]
        %v288 = vld [vmem:[#allocation3 + $0x18] sm:$0xff]
        %v289 = vld [vmem:[#allocation3 + $0x20] sm:$0xff]
        %v290 = vld [vmem:[#allocation3 + $0x28] sm:$0xff]
        %v291 = vld [vmem:[#allocation3 + $0x30] sm:$0xff]
        %v292 = vld [vmem:[#allocation3 + $0x38] sm:$0xff]
        %v293 = vld [vmem:[#allocation3 + $0x40] sm:$0xff]
        %v294 = vld [vmem:[#allocation3 + $0x48] sm:$0xff]
        %v295 = vld [vmem:[#allocation3 + $0x50] sm:$0xff]
        %v296 = vld [vmem:[#allocation3 + $0x58] sm:$0xff]
        %v297 = vld [vmem:[#allocation3 + $0x60] sm:$0xff]
        %v298 = vld [vmem:[#allocation3 + $0x68] sm:$0xff]
        %v299 = vld [vmem:[#allocation3 + $0x70] sm:$0xff]
        %v300 = vld [vmem:[#allocation3 + $0x78] sm:$0xff]
        %v301 = vld [vmem:[#allocation3 + $0x80] sm:$0xff]
        %v302 = vld [vmem:[#allocation3 + $0x88] sm:$0xff]
        %v303 = vld [vmem:[#allocation3 + $0x90] sm:$0xff]
        %v304 = vld [vmem:[#allocation3 + $0x98] sm:$0xff]
        %v305 = vld [vmem:[#allocation3 + $0xa0] sm:$0xff]
        %v306 = vld [vmem:[#allocation3 + $0xa8] sm:$0xff]
        %v307 = vld [vmem:[#allocation3 + $0xb0] sm:$0xff]
        %v308 = vld [vmem:[#allocation3 + $0xb8] sm:$0xff]
        %v309 = vld [vmem:[#allocation3 + $0xc0] sm:$0xff]
        %v310 = vld [vmem:[#allocation3 + $0xc8] sm:$0xff]
        %v311 = vld [vmem:[#allocation3 + $0xd0] sm:$0xff]
        %v312 = vld [vmem:[#allocation3 + $0xd8] sm:$0xff]
        %v313 = vld [vmem:[#allocation3 + $0xe0] sm:$0xff]
        %v314 = vld [vmem:[#allocation3 + $0xe8] sm:$0xff]
        %v315 = vld [vmem:[#allocation3 + $0xf0] sm:$0xff]
        %v316 = vld [vmem:[#allocation3 + $0xf8] sm:$0xff]
        %317 = vmatpush.msra.mxu0 %v315
        %318 = vmatpush.msra.mxu0 %v313
        %319 = vmatpush.msra.mxu0 %v311
        %320 = vmatpush.msra.mxu0 %v309
        %321 = vmatpush.msra.mxu0 %v307
        %322 = vmatpush.msra.mxu0 %v305
        %323 = vmatpush.msra.mxu0 %v303
        %324 = vmatpush.msra.mxu0 %v301
        %325 = vmatpush.msra.mxu0 %v299
        %326 = vmatpush.msra.mxu0 %v297
        %327 = vmatpush.msra.mxu0 %v295
        %328 = vmatpush.msra.mxu0 %v293
        %329 = vmatpush.msra.mxu0 %v291
        %330 = vmatpush.msra.mxu0 %v289
        %331 = vmatpush.msra.mxu0 %v287
        %332 = vmatpush.msra.mxu0 %v285
        %333 = vmatmul.f32.gmra.mxu0 %v281
        %v334 = vpop.f32.mrf.mxu0
        %v335 = vadd.f32 0.0, %v334
        %336 = vdwg.mxu0
        %337 = vmatpush.msra.mxu0 %v316
        %338 = vmatpush.msra.mxu0 %v314
        %339 = vmatpush.msra.mxu0 %v312
        %340 = vmatpush.msra.mxu0 %v310
        %341 = vmatpush.msra.mxu0 %v308
        %342 = vmatpush.msra.mxu0 %v306
        %343 = vmatpush.msra.mxu0 %v304
        %344 = vmatpush.msra.mxu0 %v302
        %345 = vmatpush.msra.mxu0 %v300
        %346 = vmatpush.msra.mxu0 %v298
        %347 = vmatpush.msra.mxu0 %v296
        %348 = vmatpush.msra.mxu0 %v294
        %349 = vmatpush.msra.mxu0 %v292
        %350 = vmatpush.msra.mxu0 %v290
        %351 = vmatpush.msra.mxu0 %v288
        %352 = vmatpush.msra.mxu0 %v286
        %353 = vmatmul.f32.gmra.mxu0 %v281
        %v354 = vpop.f32.mrf.mxu0
        %v355 = vadd.f32 0.0, %v354
        %356 = vdwg.mxu0
        %v357 = vadd.f32 %v282, %v335
        %v358 = vxor.u32 %v357, 2147483648
        %v359 = vmul.f32 %v358, 1.442695
        %v360 = vpow.pop %v359
        %v361 = vadd.f32 %v360, 1.0
        %v362 = vrcp.pop %v361
        %v363 = vmul.f32 %v361, %v362
        %v364 = vsub.f32 1.0, %v363
        %v365 = vmul.f32 %v362, %v364
        %v366 = vadd.f32 %v362, %v365
        %vm367 = vweird.f32 %v361
        %vm368 = vweird.f32 %v362
        %vm369 = vmor %vm367, %vm368
        %v370 = vsel %vm369, %v362, %v366
        %v371 = vand.u32 2147483647, %v361
        %vm372 = vcmp.eq.f32.partialorder %v371, 8.507059e+37
        %v373 = vand.u32 %v361, 2147483648
        %v374 = vor.u32 1.1754944e-38, %v373
        %v375 = vsel %vm372, %v374, %v370
        %v376 = vmul.f32 1.0, %v375
        %v377 = vadd.f32 %v283, %v355
        %v378 = vxor.u32 %v377, 2147483648
        %v379 = vmul.f32 %v378, 1.442695
        %v380 = vpow.pop %v379
        %v381 = vadd.f32 %v380, 1.0
        %v382 = vrcp.pop %v381
        %v383 = vmul.f32 %v381, %v382
        %v384 = vsub.f32 1.0, %v383
        %v385 = vmul.f32 %v382, %v384
        %v386 = vadd.f32 %v382, %v385
        %vm387 = vweird.f32 %v381
        %vm388 = vweird.f32 %v382
        %vm389 = vmor %vm387, %vm388
        %v390 = vsel %vm389, %v382, %v386
        %v391 = vand.u32 2147483647, %v381
        %vm392 = vcmp.eq.f32.partialorder %v391, 8.507059e+37
        %v393 = vand.u32 %v381, 2147483648
        %v394 = vor.u32 1.1754944e-38, %v393
        %v395 = vsel %vm392, %v394, %v390
        %v396 = vmul.f32 1.0, %v395
        %v397 = vmul.f32 %v376, %v281
        %v398 = vadd.f32 %v284, %v397
        %v399 = vtanh.pop %v398
        %v400 = vsub.f32 %v281, %v399
        %v401 = vmul.f32 %v396, %v400
        %v402 = vadd.f32 %v399, %v401
        %403 = vst [vmem:[#allocation2] sm:$0xff] %v402
        %404 = vst [vmem:[%s270] sm:$0xff] %v402
        %p405 = scmp.eq.s32.totalorder %s22, 7
        // Predicated region
        $region41: #{maingru_forward.5} parent=31 // pred_check
          %p406 = pneg %p405
        $region42: #{maingru_forward.5} parent=31 // pred_check_branch
          %408 = sbr.rel (%p406) target = $region44
        $region43: #{maingru_forward.5} parent=31 // pred_region
          %409 = vst [vmem:[%s274] sm:$0xff] %v402
        $region44: #{maingru_forward.5} parent=31 // pred_fallthru
          _
        %p410 = scmp.lt.s32.totalorder %s22, 7
        %s411 = scalar_select %p410, %s22, 7
        %p412 = scmp.lt.s32.totalorder %s21, 0
        %s413 = scalar_select %p412, %s21, 0
        %s414 = sadd.s32 %s413, %s411
        %s415 = smul.addr %s414, 8
        %s416 = scalar_lea.vmem %s3, %s415
        %p417 = scmp.lt.s32.totalorder %s21, 0
        %s418 = scalar_select %p417, %s21, 0
        %s419 = smul.addr %s418, 8
        %s420 = scalar_lea.vmem %s4, %s419
        // Predicated region
        $region45: #{maingru_forward.5} parent=31 // pred_check
          %p421 = pneg %p124
        $region46: #{maingru_forward.5} parent=31 // pred_check_branch
          %423 = sbr.rel (%p421) target = $region48
        $region47: #{maingru_forward.5} parent=31 // pred_region
          _
        $region48: #{maingru_forward.5} parent=31 // pred_fallthru
          _
        // Predicated region
        $region49: #{maingru_forward.5} parent=31 // pred_check
          %p424 = pneg %p150
        $region50: #{maingru_forward.5} parent=31 // pred_check_branch
          %426 = sbr.rel (%p424) target = $region52
        $region51: #{maingru_forward.5} parent=31 // pred_region
          _
        $region52: #{maingru_forward.5} parent=31 // pred_fallthru
          _
        // Predicated region
        $region53: #{maingru_forward.5} parent=31 // pred_check
          %p427 = pneg %p150
        $region54: #{maingru_forward.5} parent=31 // pred_check_branch
          %429 = sbr.rel (%p427) target = $region56
        $region55: #{maingru_forward.5} parent=31 // pred_region
          %p430 = scmp.lt.s32.totalorder %s21, 0
          %s431 = scalar_select %p430, %s21, 0
          %s432 = smul.addr %s431, 8
          %s433 = scalar_lea.vmem %s4, %s432
        $region56: #{maingru_forward.5} parent=31 // pred_fallthru
          _
      $region32: #{maingru_forward.5} parent=5 // pred_fallthru
        _
      %p434 = scmp.le.s32.totalorder 2, %s12
      // Predicated region
      $region57: #{maingru_forward.5} parent=5 // pred_check
        %p435 = pneg %p434
      $region58: #{maingru_forward.5} parent=5 // pred_check_branch
        %437 = sbr.rel (%p435) target = $region60
      $region59: #{maingru_forward.5} parent=5 // pred_region
        %s438 = ssub.s32 %s12, 2
        // Predicated region
        $region61: #{maingru_forward.5} parent=59 // pred_check
          %p439 = pneg %p130
        $region62: #{maingru_forward.5} parent=59 // pred_check_branch
          %441 = sbr.rel (%p439) target = $region64
        $region63: #{maingru_forward.5} parent=59 // pred_region
          %p442 = scmp.lt.s32.totalorder %s24, 7
          %s443 = scalar_select %p442, %s24, 7
          %p444 = scmp.lt.s32.totalorder %s23, 0
          %s445 = scalar_select %p444, %s23, 0
          %s446 = sadd.s32 %s445, %s443
          %s447 = smul.addr %s446, 8
          %s448 = scalar_lea.vmem %s3, %s447
        $region64: #{maingru_forward.5} parent=59 // pred_fallthru
          _
      $region60: #{maingru_forward.5} parent=5 // pred_fallthru
        _
    $region6: #{maingru_forward.5} parent=1 // loop_footer
      %s16 = sadd.s32 1, %s12
    $region7: #{maingru_forward.5} parent=1 // loop_footer_branch
      %11 = sbr.rel target = $region3
    $region8: #{maingru_forward.5} parent=1 // loop_exit
      _
    %449 = vsyncpa [#allocation4], 1
    %s450 = scalar_lea.sflag [#allocation4], 1
    %451 = vsyncpa %s450, 1

// kernel: maingru_forward.4
$region0: #{maingru_forward.4}
  #allocation0 [shape = 'u32[]', space=smem, size = 0x4, offset = 0x4, fixed_abs, tag = 'smem constant byte address 0x4 - core index']
  #allocation1 [shape = 'u32[72,128]{1,0:T(1,128)}', space=vmem, size = 0x9000, scoped, tag = 'internal scratch']
  %s0 = inlined_call_operand.vmem [shape: f32[64,128], index: 0, kind: input, shape index: {}]
  %s1 = inlined_call_operand.hbm [shape: f32[128,384], index: 1, kind: input, shape index: {}]
  %s2 = inlined_call_operand.vmem [shape: f32[64,384], index: 2, kind: output, shape index: {}]
  %s3 = sld [smem:[#allocation0]]
  $region22: #{maingru_forward.4} parent=0
    _
  %s5 = ssub.s32 1, %s3
  %s6 = scalar_select 0, %s5, %s3
  $region1: #{maingru_forward.4} parent=0
    #allocation2 [shape = 'u8[196608]{0}', space=vmem, size = 0x30000, scoped, tag = 'input window, operand 1, single buffered']
    #allocation3 [shape = 's32[1]{0}', space=sflag, size = 0x4, scoped, tag = 'scoped memory for maingru_forward.4']
    %7 = vsyncpa [#allocation3], 0
    // Predicated region
    $region2: #{maingru_forward.4} parent=1 // pred_check
      _
    $region3: #{maingru_forward.4} parent=1 // pred_check_branch
      %9 = sbr.rel (0) target = $region5
    $region4: #{maingru_forward.4} parent=1 // pred_region
      _
    $region5: #{maingru_forward.4} parent=1 // pred_fallthru
      _
    // Predicated region
    $region6: #{maingru_forward.4} parent=1 // pred_check
      _
    $region7: #{maingru_forward.4} parent=1 // pred_check_branch
      %11 = sbr.rel (0) target = $region9
    $region8: #{maingru_forward.4} parent=1 // pred_region
      %13 = vsyncadd [#allocation3], 0
      %s14 = sshll.u32 %s1, 4
      %s15 = int_to_ptr.hbm [resolvable:$true] %s14
      %s16 = sshll.u32 [#allocation2], 4
      %s17 = int_to_ptr.vmem [resolvable:$true] %s16
      %22 = dma.hbm_to_vmem [thread:$0]  %s15, 6144, %s17, [#allocation3], 384, 384, 24
    $region9: #{maingru_forward.4} parent=1 // pred_fallthru
      _
    // Predicated region
    $region10: #{maingru_forward.4} parent=1 // pred_check
      _
    $region11: #{maingru_forward.4} parent=1 // pred_check_branch
      %24 = sbr.rel (0) target = $region13
    $region12: #{maingru_forward.4} parent=1 // pred_region
      %26 = dma.done [#allocation3], 6144
    $region13: #{maingru_forward.4} parent=1 // pred_fallthru
      _
    %v27 = vld [vmem:[%s0] sm:$0xff]
    %v28 = vld [vmem:[%s0 + $0x8] sm:$0xff]
    %v29 = vld [vmem:[%s0 + $0x10] sm:$0xff]
    %v30 = vld [vmem:[%s0 + $0x18] sm:$0xff]
    %v31 = vld [vmem:[%s0 + $0x20] sm:$0xff]
    %v32 = vld [vmem:[%s0 + $0x28] sm:$0xff]
    %v33 = vld [vmem:[%s0 + $0x30] sm:$0xff]
    %v34 = vld [vmem:[%s0 + $0x38] sm:$0xff]
    %v35 = vld [vmem:[#allocation2] sm:$0xff]
    %v36 = vld [vmem:[#allocation2 + $0x8] sm:$0xff]
    %v37 = vld [vmem:[#allocation2 + $0x10] sm:$0xff]
    %v38 = vld [vmem:[#allocation2 + $0x18] sm:$0xff]
    %v39 = vld [vmem:[#allocation2 + $0x20] sm:$0xff]
    %v40 = vld [vmem:[#allocation2 + $0x28] sm:$0xff]
    %v41 = vld [vmem:[#allocation2 + $0x30] sm:$0xff]
    %v42 = vld [vmem:[#allocation2 + $0x38] sm:$0xff]
    %v43 = vld [vmem:[#allocation2 + $0x40] sm:$0xff]
    %v44 = vld [vmem:[#allocation2 + $0x48] sm:$0xff]
    %v45 = vld [vmem:[#allocation2 + $0x50] sm:$0xff]
    %v46 = vld [vmem:[#allocation2 + $0x58] sm:$0xff]
    %v47 = vld [vmem:[#allocation2 + $0x60] sm:$0xff]
    %v48 = vld [vmem:[#allocation2 + $0x68] sm:$0xff]
    %v49 = vld [vmem:[#allocation2 + $0x70] sm:$0xff]
    %v50 = vld [vmem:[#allocation2 + $0x78] sm:$0xff]
    %v51 = vld [vmem:[#allocation2 + $0x80] sm:$0xff]
    %v52 = vld [vmem:[#allocation2 + $0x88] sm:$0xff]
    %v53 = vld [vmem:[#allocation2 + $0x90] sm:$0xff]
    %v54 = vld [vmem:[#allocation2 + $0x98] sm:$0xff]
    %v55 = vld [vmem:[#allocation2 + $0xa0] sm:$0xff]
    %v56 = vld [vmem:[#allocation2 + $0xa8] sm:$0xff]
    %v57 = vld [vmem:[#allocation2 + $0xb0] sm:$0xff]
    %v58 = vld [vmem:[#allocation2 + $0xb8] sm:$0xff]
    %v59 = vld [vmem:[#allocation2 + $0xc0] sm:$0xff]
    %v60 = vld [vmem:[#allocation2 + $0xc8] sm:$0xff]
    %v61 = vld [vmem:[#allocation2 + $0xd0] sm:$0xff]
    %v62 = vld [vmem:[#allocation2 + $0xd8] sm:$0xff]
    %v63 = vld [vmem:[#allocation2 + $0xe0] sm:$0xff]
    %v64 = vld [vmem:[#allocation2 + $0xe8] sm:$0xff]
    %v65 = vld [vmem:[#allocation2 + $0xf0] sm:$0xff]
    %v66 = vld [vmem:[#allocation2 + $0xf8] sm:$0xff]
    %v67 = vld [vmem:[#allocation2 + $0x100] sm:$0xff]
    %v68 = vld [vmem:[#allocation2 + $0x108] sm:$0xff]
    %v69 = vld [vmem:[#allocation2 + $0x110] sm:$0xff]
    %v70 = vld [vmem:[#allocation2 + $0x118] sm:$0xff]
    %v71 = vld [vmem:[#allocation2 + $0x120] sm:$0xff]
    %v72 = vld [vmem:[#allocation2 + $0x128] sm:$0xff]
    %v73 = vld [vmem:[#allocation2 + $0x130] sm:$0xff]
    %v74 = vld [vmem:[#allocation2 + $0x138] sm:$0xff]
    %v75 = vld [vmem:[#allocation2 + $0x140] sm:$0xff]
    %v76 = vld [vmem:[#allocation2 + $0x148] sm:$0xff]
    %v77 = vld [vmem:[#allocation2 + $0x150] sm:$0xff]
    %v78 = vld [vmem:[#allocation2 + $0x158] sm:$0xff]
    %v79 = vld [vmem:[#allocation2 + $0x160] sm:$0xff]
    %v80 = vld [vmem:[#allocation2 + $0x168] sm:$0xff]
    %v81 = vld [vmem:[#allocation2 + $0x170] sm:$0xff]
    %v82 = vld [vmem:[#allocation2 + $0x178] sm:$0xff]
    %83 = vmatpush.msra.mxu0 %v80
    %84 = vmatpush.msra.mxu0 %v77
    %85 = vmatpush.msra.mxu0 %v74
    %86 = vmatpush.msra.mxu0 %v71
    %87 = vmatpush.msra.mxu0 %v68
    %88 = vmatpush.msra.mxu0 %v65
    %89 = vmatpush.msra.mxu0 %v62
    %90 = vmatpush.msra.mxu0 %v59
    %91 = vmatpush.msra.mxu0 %v56
    %92 = vmatpush.msra.mxu0 %v53
    %93 = vmatpush.msra.mxu0 %v50
    %94 = vmatpush.msra.mxu0 %v47
    %95 = vmatpush.msra.mxu0 %v44
    %96 = vmatpush.msra.mxu0 %v41
    %97 = vmatpush.msra.mxu0 %v38
    %98 = vmatpush.msra.mxu0 %v35
    %99 = vmatmul.f32.gmra.mxu0 %v27
    %v100 = vpop.f32.mrf.mxu0
    %v101 = vadd.f32 0.0, %v100
    %102 = vmatmul.f32.gmra.mxu0 %v28
    %v103 = vpop.f32.mrf.mxu0
    %v104 = vadd.f32 0.0, %v103
    %105 = vmatmul.f32.gmra.mxu0 %v29
    %v106 = vpop.f32.mrf.mxu0
    %v107 = vadd.f32 0.0, %v106
    %108 = vmatmul.f32.gmra.mxu0 %v30
    %v109 = vpop.f32.mrf.mxu0
    %v110 = vadd.f32 0.0, %v109
    %111 = vmatmul.f32.gmra.mxu0 %v31
    %v112 = vpop.f32.mrf.mxu0
    %v113 = vadd.f32 0.0, %v112
    %114 = vmatmul.f32.gmra.mxu0 %v32
    %v115 = vpop.f32.mrf.mxu0
    %v116 = vadd.f32 0.0, %v115
    %117 = vmatmul.f32.gmra.mxu0 %v33
    %v118 = vpop.f32.mrf.mxu0
    %v119 = vadd.f32 0.0, %v118
    %120 = vmatmul.f32.gmra.mxu0 %v34
    %v121 = vpop.f32.mrf.mxu0
    %v122 = vadd.f32 0.0, %v121
    %123 = vdwg.mxu0
    %124 = vmatpush.msra.mxu0 %v81
    %125 = vmatpush.msra.mxu0 %v78
    %126 = vmatpush.msra.mxu0 %v75
    %127 = vmatpush.msra.mxu0 %v72
    %128 = vmatpush.msra.mxu0 %v69
    %129 = vmatpush.msra.mxu0 %v66
    %130 = vmatpush.msra.mxu0 %v63
    %131 = vmatpush.msra.mxu0 %v60
    %132 = vmatpush.msra.mxu0 %v57
    %133 = vmatpush.msra.mxu0 %v54
    %134 = vmatpush.msra.mxu0 %v51
    %135 = vmatpush.msra.mxu0 %v48
    %136 = vmatpush.msra.mxu0 %v45
    %137 = vmatpush.msra.mxu0 %v42
    %138 = vmatpush.msra.mxu0 %v39
    %139 = vmatpush.msra.mxu0 %v36
    %140 = vmatmul.f32.gmra.mxu0 %v27
    %v141 = vpop.f32.mrf.mxu0
    %v142 = vadd.f32 0.0, %v141
    %143 = vmatmul.f32.gmra.mxu0 %v28
    %v144 = vpop.f32.mrf.mxu0
    %v145 = vadd.f32 0.0, %v144
    %146 = vmatmul.f32.gmra.mxu0 %v29
    %v147 = vpop.f32.mrf.mxu0
    %v148 = vadd.f32 0.0, %v147
    %149 = vmatmul.f32.gmra.mxu0 %v30
    %v150 = vpop.f32.mrf.mxu0
    %v151 = vadd.f32 0.0, %v150
    %152 = vmatmul.f32.gmra.mxu0 %v31
    %v153 = vpop.f32.mrf.mxu0
    %v154 = vadd.f32 0.0, %v153
    %155 = vmatmul.f32.gmra.mxu0 %v32
    %v156 = vpop.f32.mrf.mxu0
    %v157 = vadd.f32 0.0, %v156
    %158 = vmatmul.f32.gmra.mxu0 %v33
    %v159 = vpop.f32.mrf.mxu0
    %v160 = vadd.f32 0.0, %v159
    %161 = vmatmul.f32.gmra.mxu0 %v34
    %v162 = vpop.f32.mrf.mxu0
    %v163 = vadd.f32 0.0, %v162
    %164 = vdwg.mxu0
    %165 = vmatpush.msra.mxu0 %v82
    %166 = vmatpush.msra.mxu0 %v79
    %167 = vmatpush.msra.mxu0 %v76
    %168 = vmatpush.msra.mxu0 %v73
    %169 = vmatpush.msra.mxu0 %v70
    %170 = vmatpush.msra.mxu0 %v67
    %171 = vmatpush.msra.mxu0 %v64
    %172 = vmatpush.msra.mxu0 %v61
    %173 = vmatpush.msra.mxu0 %v58
    %174 = vmatpush.msra.mxu0 %v55
    %175 = vmatpush.msra.mxu0 %v52
    %176 = vmatpush.msra.mxu0 %v49
    %177 = vmatpush.msra.mxu0 %v46
    %178 = vmatpush.msra.mxu0 %v43
    %179 = vmatpush.msra.mxu0 %v40
    %180 = vmatpush.msra.mxu0 %v37
    %181 = vmatmul.f32.gmra.mxu0 %v27
    %v182 = vpop.f32.mrf.mxu0
    %v183 = vadd.f32 0.0, %v182
    %184 = vmatmul.f32.gmra.mxu0 %v28
    %v185 = vpop.f32.mrf.mxu0
    %v186 = vadd.f32 0.0, %v185
    %187 = vmatmul.f32.gmra.mxu0 %v29
    %v188 = vpop.f32.mrf.mxu0
    %v189 = vadd.f32 0.0, %v188
    %190 = vmatmul.f32.gmra.mxu0 %v30
    %v191 = vpop.f32.mrf.mxu0
    %v192 = vadd.f32 0.0, %v191
    %193 = vmatmul.f32.gmra.mxu0 %v31
    %v194 = vpop.f32.mrf.mxu0
    %v195 = vadd.f32 0.0, %v194
    %196 = vmatmul.f32.gmra.mxu0 %v32
    %v197 = vpop.f32.mrf.mxu0
    %v198 = vadd.f32 0.0, %v197
    %199 = vmatmul.f32.gmra.mxu0 %v33
    %v200 = vpop.f32.mrf.mxu0
    %v201 = vadd.f32 0.0, %v200
    %202 = vmatmul.f32.gmra.mxu0 %v34
    %v203 = vpop.f32.mrf.mxu0
    %v204 = vadd.f32 0.0, %v203
    %205 = vdwg.mxu0
    %206 = vst [vmem:[%s2] sm:$0xff] %v101
    %207 = vst [vmem:[%s2 + $0x8] sm:$0xff] %v142
    %208 = vst [vmem:[%s2 + $0x10] sm:$0xff] %v183
    %209 = vst [vmem:[%s2 + $0x18] sm:$0xff] %v104
    %210 = vst [vmem:[%s2 + $0x20] sm:$0xff] %v145
    %211 = vst [vmem:[%s2 + $0x28] sm:$0xff] %v186
    %212 = vst [vmem:[%s2 + $0x30] sm:$0xff] %v107
    %213 = vst [vmem:[%s2 + $0x38] sm:$0xff] %v148
    %214 = vst [vmem:[%s2 + $0x40] sm:$0xff] %v189
    %215 = vst [vmem:[%s2 + $0x48] sm:$0xff] %v110
    %216 = vst [vmem:[%s2 + $0x50] sm:$0xff] %v151
    %217 = vst [vmem:[%s2 + $0x58] sm:$0xff] %v192
    %218 = vst [vmem:[%s2 + $0x60] sm:$0xff] %v113
    %219 = vst [vmem:[%s2 + $0x68] sm:$0xff] %v154
    %220 = vst [vmem:[%s2 + $0x70] sm:$0xff] %v195
    %221 = vst [vmem:[%s2 + $0x78] sm:$0xff] %v116
    %222 = vst [vmem:[%s2 + $0x80] sm:$0xff] %v157
    %223 = vst [vmem:[%s2 + $0x88] sm:$0xff] %v198
    %224 = vst [vmem:[%s2 + $0x90] sm:$0xff] %v119
    %225 = vst [vmem:[%s2 + $0x98] sm:$0xff] %v160
    %226 = vst [vmem:[%s2 + $0xa0] sm:$0xff] %v201
    %227 = vst [vmem:[%s2 + $0xa8] sm:$0xff] %v122
    %228 = vst [vmem:[%s2 + $0xb0] sm:$0xff] %v163
    %229 = vst [vmem:[%s2 + $0xb8] sm:$0xff] %v204
    // Predicated region
    $region14: #{maingru_forward.4} parent=1 // pred_check
      _
    $region15: #{maingru_forward.4} parent=1 // pred_check_branch
      %231 = sbr.rel (0) target = $region17
    $region16: #{maingru_forward.4} parent=1 // pred_region
      _
    $region17: #{maingru_forward.4} parent=1 // pred_fallthru
      _
    // Predicated region
    $region18: #{maingru_forward.4} parent=1 // pred_check
      _
    $region19: #{maingru_forward.4} parent=1 // pred_check_branch
      %233 = sbr.rel (0) target = $region21
    $region20: #{maingru_forward.4} parent=1 // pred_region
      _
    $region21: #{maingru_forward.4} parent=1 // pred_fallthru
      _
    %234 = vsyncpa [#allocation3], 1

// kernel: maingru_forward.7
$region0: #{maingru_forward.7}
  #allocation0 [shape = 'u32[]', space=smem, size = 0x4, offset = 0x4, fixed_abs, tag = 'smem constant byte address 0x4 - core index']
  #allocation1 [shape = 'u32[72,128]{1,0:T(1,128)}', space=vmem, size = 0x9000, scoped, tag = 'internal scratch']
  #allocation2 [shape = 'f32[8,128]{1,0:T(8,128)}', space=vmem, size = 0x1000, scoped, tag = 'scratch operand']
  %s0 = inlined_call_operand.vmem [shape: f32[8,8,384], index: 0, kind: input, shape index: {}]
  %s1 = inlined_call_operand.vmem [shape: f32[8,128], index: 1, kind: input, shape index: {}]
  %s2 = inlined_call_operand.hbm [shape: f32[128,256], index: 2, kind: input, shape index: {}]
  %s3 = inlined_call_operand.hbm [shape: f32[128,128], index: 3, kind: input, shape index: {}]
  %s4 = inlined_call_operand.vmem [shape: f32[1,128], index: 4, kind: input, shape index: {}]
  %s5 = inlined_call_operand.vmem [shape: f32[8,8,128], index: 5, kind: output, shape index: {0}]
  %s6 = inlined_call_operand.vmem [shape: f32[8,128], index: 6, kind: output, shape index: {1}]
  %7 = xla_tuple %s5, %s6
  %s8 = sld [smem:[#allocation0]]
  $region77: #{maingru_forward.7} parent=0
    _
  %s10 = ssub.s32 1, %s8
  %s11 = scalar_select 0, %s10, %s8
  $region1: #{maingru_forward.7} parent=0
    #allocation3 [shape = 'u8[131072]{0}', space=vmem, size = 0x20000, scoped, tag = 'input window, operand 2, single buffered']
    #allocation4 [shape = 's32[2]{0}', space=sflag, size = 0x8, scoped, tag = 'scoped memory for maingru_forward.7']
    #allocation5 [shape = 'u8[65536]{0}', space=vmem, size = 0x10000, scoped, tag = 'input window, operand 3, single buffered']
    #allocation6 [shape = 's32[1]{0}', space=sflag, size = 0x4, scoped, tag = 'scoped memory for maingru_forward.7']
    %12 = vsyncpa [#allocation4], 0
    %13 = vsyncpa [#allocation6], 0
    loop: start=0, step=1, limit=10
    $region2: #{maingru_forward.7} parent=1 // loop_pre_header
      _
    $region3: #{maingru_forward.7} parent=1 // loop_header
      %s15 = sphi 0, %s19
      %p16 = scmp.ge.s32.totalorder %s15, 10
      %s22 = sphi 0, %s34
      %s23 = sphi 0, %s30
      %s24 = sphi 0, %s22
      %s25 = sphi 0, %s23
      %s26 = sphi 0, %s24
      %s27 = sphi 0, %s25
      %s39 = sphi 0, %s41
      %s42 = sphi 0, %s39
      %s43 = sphi 0, %s42
      %s59 = sphi 0, %s43
      %s65 = sphi 0, %s67
      %s68 = sphi 0, %s65
      %s69 = sphi 0, %s68
      %s85 = sphi 0, %s69
      %s89 = sphi 0, %s89
      %s91 = sphi 0, %s89
      %s92 = sphi 0, %s91
      %s106 = sphi 0, %s92
      %s110 = sphi 0, %s110
      %s112 = sphi 0, %s110
      %s113 = sphi 0, %s112
      %s127 = sphi 0, %s113
      %s131 = sphi 0, %s131
      %s133 = sphi 0, %s131
      %s134 = sphi 0, %s133
      %s148 = sphi 0, %s134
      %s156 = sphi 0, %s158
      %s159 = sphi 0, %s156
      %s160 = sphi 0, %s159
      %s176 = sphi 0, %s160
      %s182 = sphi 0, %s184
      %s185 = sphi 0, %s182
      %s186 = sphi 0, %s185
      %s202 = sphi 0, %s186
    $region4: #{maingru_forward.7} parent=1 // loop_header_branch
      %18 = sbr.rel (%p16) target = $region8
    $region5: #{maingru_forward.7} parent=1 // loop_body
      %s20 = ssub.s32 %s15, 1
      %s21 = ssub.s32 %s15, 2
      %s28 = sadd.s32 1, %s23
      %p29 = scmp.ge.s32.totalorder %s28, 8
      %s30 = scalar_select %p29, 0, %s28
      %s31 = sadd.s32 1, %s22
      %s32 = scalar_select %p29, %s31, %s22
      %p33 = scmp.ge.s32.totalorder %s32, 1
      %s34 = scalar_select %p33, 0, %s32
      %s35 = ssub.s32 %s23, %s30
      %s36 = ssub.s32 %s22, %s34
      %s37 = sor.u32 %s35, %s36
      %p38 = scmp.eq.s32.totalorder %s37, 0
      %s40 = sadd.s32 %s39, 1
      %s41 = scalar_select %p38, %s39, %s40
      %p44 = pneg %p38
      %p45 = scmp.eq.s32.totalorder %s15, 7
      %p46 = por %p44, %p45
      %p47 = scmp.ne.s32.totalorder %s39, %s42
      %p48 = scmp.eq.s32.totalorder %s15, 0
      %p49 = por %p47, %p48
      %p50 = scmp.ne.s32.totalorder %s39, %s42
      %p51 = scmp.eq.s32.totalorder %s20, 7
      %p52 = por %p50, %p51
      %p53 = scmp.ne.s32.totalorder %s42, %s43
      %p54 = scmp.eq.s32.totalorder %s20, 0
      %p55 = por %p53, %p54
      %p56 = scmp.ne.s32.totalorder %s42, %s43
      %p57 = scmp.eq.s32.totalorder %s21, 7
      %p58 = por %p56, %p57
      %p60 = scmp.ne.s32.totalorder %s43, %s59
      %p61 = scmp.eq.s32.totalorder %s21, 0
      %p62 = por %p60, %p61
      %s63 = ssub.s32 %s22, %s34
      %p64 = scmp.eq.s32.totalorder %s63, 0
      %s66 = sadd.s32 %s65, 1
      %s67 = scalar_select %p64, %s65, %s66
      %p70 = pneg %p64
      %p71 = scmp.eq.s32.totalorder %s15, 7
      %p72 = por %p70, %p71
      %p73 = scmp.ne.s32.totalorder %s65, %s68
      %p74 = scmp.eq.s32.totalorder %s15, 0
      %p75 = por %p73, %p74
      %p76 = scmp.ne.s32.totalorder %s65, %s68
      %p77 = scmp.eq.s32.totalorder %s20, 7
      %p78 = por %p76, %p77
      %p79 = scmp.ne.s32.totalorder %s68, %s69
      %p80 = scmp.eq.s32.totalorder %s20, 0
      %p81 = por %p79, %p80
      %p82 = scmp.ne.s32.totalorder %s68, %s69
      %p83 = scmp.eq.s32.totalorder %s21, 7
      %p84 = por %p82, %p83
      %p86 = scmp.ne.s32.totalorder %s69, %s85
      %p87 = scmp.eq.s32.totalorder %s21, 0
      %p88 = por %p86, %p87
      %s90 = sadd.s32 %s89, 1
      %p93 = scmp.eq.s32.totalorder %s15, 7
      %p94 = scmp.ne.s32.totalorder %s89, %s91
      %p95 = scmp.eq.s32.totalorder %s15, 0
      %p96 = por %p94, %p95
      %p97 = scmp.ne.s32.totalorder %s89, %s91
      %p98 = scmp.eq.s32.totalorder %s20, 7
      %p99 = por %p97, %p98
      %p100 = scmp.ne.s32.totalorder %s91, %s92
      %p101 = scmp.eq.s32.totalorder %s20, 0
      %p102 = por %p100, %p101
      %p103 = scmp.ne.s32.totalorder %s91, %s92
      %p104 = scmp.eq.s32.totalorder %s21, 7
      %p105 = por %p103, %p104
      %p107 = scmp.ne.s32.totalorder %s92, %s106
      %p108 = scmp.eq.s32.totalorder %s21, 0
      %p109 = por %p107, %p108
      %s111 = sadd.s32 %s110, 1
      %p114 = scmp.eq.s32.totalorder %s15, 7
      %p115 = scmp.ne.s32.totalorder %s110, %s112
      %p116 = scmp.eq.s32.totalorder %s15, 0
      %p117 = por %p115, %p116
      %p118 = scmp.ne.s32.totalorder %s110, %s112
      %p119 = scmp.eq.s32.totalorder %s20, 7
      %p120 = por %p118, %p119
      %p121 = scmp.ne.s32.totalorder %s112, %s113
      %p122 = scmp.eq.s32.totalorder %s20, 0
      %p123 = por %p121, %p122
      %p124 = scmp.ne.s32.totalorder %s112, %s113
      %p125 = scmp.eq.s32.totalorder %s21, 7
      %p126 = por %p124, %p125
      %p128 = scmp.ne.s32.totalorder %s113, %s127
      %p129 = scmp.eq.s32.totalorder %s21, 0
      %p130 = por %p128, %p129
      %s132 = sadd.s32 %s131, 1
      %p135 = scmp.eq.s32.totalorder %s15, 7
      %p136 = scmp.ne.s32.totalorder %s131, %s133
      %p137 = scmp.eq.s32.totalorder %s15, 0
      %p138 = por %p136, %p137
      %p139 = scmp.ne.s32.totalorder %s131, %s133
      %p140 = scmp.eq.s32.totalorder %s20, 7
      %p141 = por %p139, %p140
      %p142 = scmp.ne.s32.totalorder %s133, %s134
      %p143 = scmp.eq.s32.totalorder %s20, 0
      %p144 = por %p142, %p143
      %p145 = scmp.ne.s32.totalorder %s133, %s134
      %p146 = scmp.eq.s32.totalorder %s21, 7
      %p147 = por %p145, %p146
      %p149 = scmp.ne.s32.totalorder %s134, %s148
      %p150 = scmp.eq.s32.totalorder %s21, 0
      %p151 = por %p149, %p150
      %s152 = ssub.s32 %s23, %s30
      %s153 = ssub.s32 %s22, %s34
      %s154 = sor.u32 %s152, %s153
      %p155 = scmp.eq.s32.totalorder %s154, 0
      %s157 = sadd.s32 %s156, 1
      %s158 = scalar_select %p155, %s156, %s157
      %p161 = pneg %p155
      %p162 = scmp.eq.s32.totalorder %s15, 7
      %p163 = por %p161, %p162
      %p164 = scmp.ne.s32.totalorder %s156, %s159
      %p165 = scmp.eq.s32.totalorder %s15, 0
      %p166 = por %p164, %p165
      %p167 = scmp.ne.s32.totalorder %s156, %s159
      %p168 = scmp.eq.s32.totalorder %s20, 7
      %p169 = por %p167, %p168
      %p170 = scmp.ne.s32.totalorder %s159, %s160
      %p171 = scmp.eq.s32.totalorder %s20, 0
      %p172 = por %p170, %p171
      %p173 = scmp.ne.s32.totalorder %s159, %s160
      %p174 = scmp.eq.s32.totalorder %s21, 7
      %p175 = por %p173, %p174
      %p177 = scmp.ne.s32.totalorder %s160, %s176
      %p178 = scmp.eq.s32.totalorder %s21, 0
      %p179 = por %p177, %p178
      %s180 = ssub.s32 %s22, %s34
      %p181 = scmp.eq.s32.totalorder %s180, 0
      %s183 = sadd.s32 %s182, 1
      %s184 = scalar_select %p181, %s182, %s183
      %p187 = pneg %p181
      %p188 = scmp.eq.s32.totalorder %s15, 7
      %p189 = por %p187, %p188
      %p190 = scmp.ne.s32.totalorder %s182, %s185
      %p191 = scmp.eq.s32.totalorder %s15, 0
      %p192 = por %p190, %p191
      %p193 = scmp.ne.s32.totalorder %s182, %s185
      %p194 = scmp.eq.s32.totalorder %s20, 7
      %p195 = por %p193, %p194
      %p196 = scmp.ne.s32.totalorder %s185, %s186
      %p197 = scmp.eq.s32.totalorder %s20, 0
      %p198 = por %p196, %p197
      %p199 = scmp.ne.s32.totalorder %s185, %s186
      %p200 = scmp.eq.s32.totalorder %s21, 7
      %p201 = por %p199, %p200
      %p203 = scmp.ne.s32.totalorder %s186, %s202
      %p204 = scmp.eq.s32.totalorder %s21, 0
      %p205 = por %p203, %p204
      %p206 = scmp.le.s32.totalorder 1, %s15
      %p207 = scmp.lt.s32.totalorder %s15, 9
      %p208 = pnand %p206, %p207
      %p209 = pneg %p208
      // Predicated region
      $region9: #{maingru_forward.7} parent=5 // pred_check
        _
      $region10: #{maingru_forward.7} parent=5 // pred_check_branch
        %211 = sbr.rel (%p208) target = $region12
      $region11: #{maingru_forward.7} parent=5 // pred_region
        %s212 = ssub.s32 %s15, 1
        // Predicated region
        $region13: #{maingru_forward.7} parent=11 // pred_check
          %p213 = pneg %p81
        $region14: #{maingru_forward.7} parent=11 // pred_check_branch
          %215 = sbr.rel (%p213) target = $region16
        $region15: #{maingru_forward.7} parent=11 // pred_region
          %p216 = scmp.lt.s32.totalorder %s24, 0
          %s217 = scalar_select %p216, %s24, 0
          %s218 = smul.addr %s217, 8
          %s219 = scalar_lea.vmem %s1, %s218
        $region16: #{maingru_forward.7} parent=11 // pred_fallthru
          _
        // Predicated region
        $region17: #{maingru_forward.7} parent=11 // pred_check
          %p220 = pneg %p102
        $region18: #{maingru_forward.7} parent=11 // pred_check_branch
          %222 = sbr.rel (%p220) target = $region20
        $region19: #{maingru_forward.7} parent=11 // pred_region
          %224 = vsyncadd [#allocation4], 0
          %s225 = sshll.u32 %s2, 4
          %s226 = int_to_ptr.hbm [resolvable:$true] %s225
          %s227 = sshll.u32 [#allocation3], 4
          %s228 = int_to_ptr.vmem [resolvable:$true] %s227
          %233 = dma.hbm_to_vmem [thread:$0]  %s226, 4096, %s228, [#allocation4], 256, 256, 16
        $region20: #{maingru_forward.7} parent=11 // pred_fallthru
          _
        // Predicated region
        $region21: #{maingru_forward.7} parent=11 // pred_check
          %p234 = pneg %p123
        $region22: #{maingru_forward.7} parent=11 // pred_check_branch
          %236 = sbr.rel (%p234) target = $region24
        $region23: #{maingru_forward.7} parent=11 // pred_region
          %238 = vsyncadd [#allocation6], 0
          %s239 = sshll.u32 %s3, 4
          %s240 = int_to_ptr.hbm [resolvable:$true] %s239
          %s241 = sshll.u32 [#allocation5], 4
          %s242 = int_to_ptr.vmem [resolvable:$true] %s241
          %247 = dma.hbm_to_vmem [thread:$0]  %s240, 2048, %s242, [#allocation6], 128, 128, 8
        $region24: #{maingru_forward.7} parent=11 // pred_fallthru
          _
        // Predicated region
        $region25: #{maingru_forward.7} parent=11 // pred_check
          %p248 = pneg %p144
        $region26: #{maingru_forward.7} parent=11 // pred_check_branch
          %250 = sbr.rel (%p248) target = $region28
        $region27: #{maingru_forward.7} parent=11 // pred_region
          _
        $region28: #{maingru_forward.7} parent=11 // pred_fallthru
          _
      $region12: #{maingru_forward.7} parent=5 // pred_fallthru
        _
      %p251 = scmp.lt.s32.totalorder %s15, 8
      // Predicated region
      $region29: #{maingru_forward.7} parent=5 // pred_check
        %p252 = pneg %p251
      $region30: #{maingru_forward.7} parent=5 // pred_check_branch
        %254 = sbr.rel (%p252) target = $region32
      $region31: #{maingru_forward.7} parent=5 // pred_region
        // Predicated region
        $region33: #{maingru_forward.7} parent=31 // pred_check
          %p255 = pneg %p49
        $region34: #{maingru_forward.7} parent=31 // pred_check_branch
          %257 = sbr.rel (%p255) target = $region36
        $region35: #{maingru_forward.7} parent=31 // pred_region
          %p258 = scmp.lt.s32.totalorder %s23, 7
          %s259 = scalar_select %p258, %s23, 7
          %p260 = scmp.lt.s32.totalorder %s22, 0
          %s261 = scalar_select %p260, %s22, 0
          %s262 = smul.addr %s261, 3
          %s263 = smul.addr %s259, 3
          %s264 = sadd.s32 %s262, %s263
          %s265 = smul.addr %s264, 8
          %s266 = scalar_lea.vmem %s0, %s265
        $region36: #{maingru_forward.7} parent=31 // pred_fallthru
          _
      $region32: #{maingru_forward.7} parent=5 // pred_fallthru
        _
      %p267 = scmp.le.s32.totalorder 1, %s15
      %p268 = scmp.lt.s32.totalorder %s15, 9
      %p269 = pnand %p267, %p268
      %p270 = pneg %p269
      // Predicated region
      $region37: #{maingru_forward.7} parent=5 // pred_check
        _
      $region38: #{maingru_forward.7} parent=5 // pred_check_branch
        %272 = sbr.rel (%p269) target = $region40
      $region39: #{maingru_forward.7} parent=5 // pred_region
        %s273 = ssub.s32 %s15, 1
        // Predicated region
        $region41: #{maingru_forward.7} parent=39 // pred_check
          %p274 = pneg %p102
        $region42: #{maingru_forward.7} parent=39 // pred_check_branch
          %276 = sbr.rel (%p274) target = $region44
        $region43: #{maingru_forward.7} parent=39 // pred_region
          %278 = dma.done [#allocation4], 4096
        $region44: #{maingru_forward.7} parent=39 // pred_fallthru
          _
        // Predicated region
        $region45: #{maingru_forward.7} parent=39 // pred_check
          %p279 = pneg %p123
        $region46: #{maingru_forward.7} parent=39 // pred_check_branch
          %281 = sbr.rel (%p279) target = $region48
        $region47: #{maingru_forward.7} parent=39 // pred_region
          %283 = dma.done [#allocation6], 2048
        $region48: #{maingru_forward.7} parent=39 // pred_fallthru
          _
        %p284 = scmp.lt.s32.totalorder %s25, 7
        %s285 = scalar_select %p284, %s25, 7
        %p286 = scmp.lt.s32.totalorder %s24, 0
        %s287 = scalar_select %p286, %s24, 0
        %s288 = smul.addr %s287, 3
        %s289 = smul.addr %s285, 3
        %s290 = sadd.s32 %s288, %s289
        %s291 = smul.addr %s290, 8
        %s292 = scalar_lea.vmem %s0, %s291
        %p293 = pneg %p55
        %p294 = pneg %p52
        %p295 = scmp.lt.s32.totalorder %s24, 0
        %s296 = scalar_select %p295, %s24, 0
        %s297 = smul.addr %s296, 8
        %s298 = scalar_lea.vmem %s1, %s297
        %p299 = pneg %p81
        %p300 = pneg %p78
        %p301 = pneg %p102
        %p302 = pneg %p99
        %p303 = pneg %p123
        %p304 = pneg %p120
        %p305 = pneg %p144
        %p306 = pneg %p141
        %p307 = pneg %p172
        %p308 = pneg %p169
        %p309 = scmp.lt.s32.totalorder %s25, 7
        %s310 = scalar_select %p309, %s25, 7
        %p311 = scmp.lt.s32.totalorder %s24, 0
        %s312 = scalar_select %p311, %s24, 0
        %s313 = sadd.s32 %s312, %s310
        %s314 = smul.addr %s313, 8
        %s315 = scalar_lea.vmem %s5, %s314
        %p316 = pneg %p198
        %p317 = pneg %p195
        %p318 = scmp.lt.s32.totalorder %s24, 0
        %s319 = scalar_select %p318, %s24, 0
        %s320 = smul.addr %s319, 8
        %s321 = scalar_lea.vmem %s6, %s320
        %p322 = scmp.lt.s32.totalorder %s25, 7
        %s323 = scalar_select %p322, %s25, 7
        %p324 = scmp.lt.s32.totalorder %s24, 0
        %s325 = scalar_select %p324, %s24, 0
        %s326 = smul.addr %s325, 3
        %s327 = smul.addr %s323, 3
        %s328 = sadd.s32 %s326, %s327
        %s329 = smul.addr %s328, 8
        %s330 = scalar_lea.vmem %s0, %s329
        %p331 = scmp.lt.s32.totalorder %s24, 0
        %s332 = scalar_select %p331, %s24, 0
        %s333 = smul.addr %s332, 8
        %s334 = scalar_lea.vmem %s1, %s333
        %p335 = scmp.lt.s32.totalorder %s25, 7
        %s336 = scalar_select %p335, %s25, 7
        %p337 = scmp.lt.s32.totalorder %s24, 0
        %s338 = scalar_select %p337, %s24, 0
        %s339 = sadd.s32 %s338, %s336
        %s340 = smul.addr %s339, 8
        %s341 = scalar_lea.vmem %s5, %s340
        %p342 = scmp.lt.s32.totalorder %s24, 0
        %s343 = scalar_select %p342, %s24, 0
        %s344 = smul.addr %s343, 8
        %s345 = scalar_lea.vmem %s6, %s344
        %p346 = scmp.eq.s32.totalorder %s25, 0
        // Predicated region
        $region49: #{maingru_forward.7} parent=39 // pred_check
          %p347 = pneg %p346
        $region50: #{maingru_forward.7} parent=39 // pred_check_branch
          %349 = sbr.rel (%p347) target = $region52
        $region51: #{maingru_forward.7} parent=39 // pred_region
          %v350 = vld [vmem:[%s334] sm:$0xff]
          %351 = vst [vmem:[#allocation2] sm:$0xff] %v350
        $region52: #{maingru_forward.7} parent=39 // pred_fallthru
          _
        %v352 = vld [vmem:[#allocation2] sm:$0xff]
        %v353 = vld [vmem:[%s330] sm:$0xff]
        %v354 = vld [vmem:[%s330 + $0x8] sm:$0xff]
        %v355 = vld [vmem:[%s330 + $0x10] sm:$0xff]
        %v356 = vld [vmem:[#allocation3] sm:$0xff]
        %v357 = vld [vmem:[#allocation3 + $0x8] sm:$0xff]
        %v358 = vld [vmem:[#allocation3 + $0x10] sm:$0xff]
        %v359 = vld [vmem:[#allocation3 + $0x18] sm:$0xff]
        %v360 = vld [vmem:[#allocation3 + $0x20] sm:$0xff]
        %v361 = vld [vmem:[#allocation3 + $0x28] sm:$0xff]
        %v362 = vld [vmem:[#allocation3 + $0x30] sm:$0xff]
        %v363 = vld [vmem:[#allocation3 + $0x38] sm:$0xff]
        %v364 = vld [vmem:[#allocation3 + $0x40] sm:$0xff]
        %v365 = vld [vmem:[#allocation3 + $0x48] sm:$0xff]
        %v366 = vld [vmem:[#allocation3 + $0x50] sm:$0xff]
        %v367 = vld [vmem:[#allocation3 + $0x58] sm:$0xff]
        %v368 = vld [vmem:[#allocation3 + $0x60] sm:$0xff]
        %v369 = vld [vmem:[#allocation3 + $0x68] sm:$0xff]
        %v370 = vld [vmem:[#allocation3 + $0x70] sm:$0xff]
        %v371 = vld [vmem:[#allocation3 + $0x78] sm:$0xff]
        %v372 = vld [vmem:[#allocation3 + $0x80] sm:$0xff]
        %v373 = vld [vmem:[#allocation3 + $0x88] sm:$0xff]
        %v374 = vld [vmem:[#allocation3 + $0x90] sm:$0xff]
        %v375 = vld [vmem:[#allocation3 + $0x98] sm:$0xff]
        %v376 = vld [vmem:[#allocation3 + $0xa0] sm:$0xff]
        %v377 = vld [vmem:[#allocation3 + $0xa8] sm:$0xff]
        %v378 = vld [vmem:[#allocation3 + $0xb0] sm:$0xff]
        %v379 = vld [vmem:[#allocation3 + $0xb8] sm:$0xff]
        %v380 = vld [vmem:[#allocation3 + $0xc0] sm:$0xff]
        %v381 = vld [vmem:[#allocation3 + $0xc8] sm:$0xff]
        %v382 = vld [vmem:[#allocation3 + $0xd0] sm:$0xff]
        %v383 = vld [vmem:[#allocation3 + $0xd8] sm:$0xff]
        %v384 = vld [vmem:[#allocation3 + $0xe0] sm:$0xff]
        %v385 = vld [vmem:[#allocation3 + $0xe8] sm:$0xff]
        %v386 = vld [vmem:[#allocation3 + $0xf0] sm:$0xff]
        %v387 = vld [vmem:[#allocation3 + $0xf8] sm:$0xff]
        %388 = vmatpush.msra.mxu0 %v386
        %389 = vmatpush.msra.mxu0 %v384
        %390 = vmatpush.msra.mxu0 %v382
        %391 = vmatpush.msra.mxu0 %v380
        %392 = vmatpush.msra.mxu0 %v378
        %393 = vmatpush.msra.mxu0 %v376
        %394 = vmatpush.msra.mxu0 %v374
        %395 = vmatpush.msra.mxu0 %v372
        %396 = vmatpush.msra.mxu0 %v370
        %397 = vmatpush.msra.mxu0 %v368
        %398 = vmatpush.msra.mxu0 %v366
        %399 = vmatpush.msra.mxu0 %v364
        %400 = vmatpush.msra.mxu0 %v362
        %401 = vmatpush.msra.mxu0 %v360
        %402 = vmatpush.msra.mxu0 %v358
        %403 = vmatpush.msra.mxu0 %v356
        %404 = vmatmul.f32.gmra.mxu0 %v352
        %v405 = vpop.f32.mrf.mxu0
        %v406 = vadd.f32 0.0, %v405
        %407 = vdwg.mxu0
        %408 = vmatpush.msra.mxu0 %v387
        %409 = vmatpush.msra.mxu0 %v385
        %410 = vmatpush.msra.mxu0 %v383
        %411 = vmatpush.msra.mxu0 %v381
        %412 = vmatpush.msra.mxu0 %v379
        %413 = vmatpush.msra.mxu0 %v377
        %414 = vmatpush.msra.mxu0 %v375
        %415 = vmatpush.msra.mxu0 %v373
        %416 = vmatpush.msra.mxu0 %v371
        %417 = vmatpush.msra.mxu0 %v369
        %418 = vmatpush.msra.mxu0 %v367
        %419 = vmatpush.msra.mxu0 %v365
        %420 = vmatpush.msra.mxu0 %v363
        %421 = vmatpush.msra.mxu0 %v361
        %422 = vmatpush.msra.mxu0 %v359
        %423 = vmatpush.msra.mxu0 %v357
        %424 = vmatmul.f32.gmra.mxu0 %v352
        %v425 = vpop.f32.mrf.mxu0
        %v426 = vadd.f32 0.0, %v425
        %427 = vdwg.mxu0
        %v428 = vadd.f32 %v353, %v406
        %v429 = vxor.u32 %v428, 2147483648
        %v430 = vmul.f32 %v429, 1.442695
        %v431 = vpow.pop %v430
        %v432 = vadd.f32 %v431, 1.0
        %v433 = vrcp.pop %v432
        %v434 = vmul.f32 %v432, %v433
        %v435 = vsub.f32 1.0, %v434
        %v436 = vmul.f32 %v433, %v435
        %v437 = vadd.f32 %v433, %v436
        %vm438 = vweird.f32 %v432
        %vm439 = vweird.f32 %v433
        %vm440 = vmor %vm438, %vm439
        %v441 = vsel %vm440, %v433, %v437
        %v442 = vand.u32 2147483647, %v432
        %vm443 = vcmp.eq.f32.partialorder %v442, 8.507059e+37
        %v444 = vand.u32 %v432, 2147483648
        %v445 = vor.u32 1.1754944e-38, %v444
        %v446 = vsel %vm443, %v445, %v441
        %v447 = vmul.f32 1.0, %v446
        %v448 = vadd.f32 %v354, %v426
        %v449 = vxor.u32 %v448, 2147483648
        %v450 = vmul.f32 %v449, 1.442695
        %v451 = vpow.pop %v450
        %v452 = vadd.f32 %v451, 1.0
        %v453 = vrcp.pop %v452
        %v454 = vmul.f32 %v452, %v453
        %v455 = vsub.f32 1.0, %v454
        %v456 = vmul.f32 %v453, %v455
        %v457 = vadd.f32 %v453, %v456
        %vm458 = vweird.f32 %v452
        %vm459 = vweird.f32 %v453
        %vm460 = vmor %vm458, %vm459
        %v461 = vsel %vm460, %v453, %v457
        %v462 = vand.u32 2147483647, %v452
        %vm463 = vcmp.eq.f32.partialorder %v462, 8.507059e+37
        %v464 = vand.u32 %v452, 2147483648
        %v465 = vor.u32 1.1754944e-38, %v464
        %v466 = vsel %vm463, %v465, %v461
        %v467 = vmul.f32 1.0, %v466
        %v468 = vmul.f32 %v447, %v352
        %v469 = vadd.f32 %v355, %v468
        %v470 = vtanh.pop %v469
        %v471 = vsub.f32 %v352, %v470
        %v472 = vmul.f32 %v467, %v471
        %v473 = vadd.f32 %v470, %v472
        %474 = vst [vmem:[#allocation2] sm:$0xff] %v473
        %v475 = vld [vmem:[#allocation5] sm:$0xff]
        %v476 = vld [vmem:[#allocation5 + $0x8] sm:$0xff]
        %v477 = vld [vmem:[#allocation5 + $0x10] sm:$0xff]
        %v478 = vld [vmem:[#allocation5 + $0x18] sm:$0xff]
        %v479 = vld [vmem:[#allocation5 + $0x20] sm:$0xff]
        %v480 = vld [vmem:[#allocation5 + $0x28] sm:$0xff]
        %v481 = vld [vmem:[#allocation5 + $0x30] sm:$0xff]
        %v482 = vld [vmem:[#allocation5 + $0x38] sm:$0xff]
        %v483 = vld [vmem:[#allocation5 + $0x40] sm:$0xff]
        %v484 = vld [vmem:[#allocation5 + $0x48] sm:$0xff]
        %v485 = vld [vmem:[#allocation5 + $0x50] sm:$0xff]
        %v486 = vld [vmem:[#allocation5 + $0x58] sm:$0xff]
        %v487 = vld [vmem:[#allocation5 + $0x60] sm:$0xff]
        %v488 = vld [vmem:[#allocation5 + $0x68] sm:$0xff]
        %v489 = vld [vmem:[#allocation5 + $0x70] sm:$0xff]
        %v490 = vld [vmem:[#allocation5 + $0x78] sm:$0xff]
        %v491 = vld [vmem:[%s4] sm:$0x1]
        %v493 = vperm.slane %v491, 0
        %495 = vmatpush.msra.mxu0 %v490
        %496 = vmatpush.msra.mxu0 %v489
        %497 = vmatpush.msra.mxu0 %v488
        %498 = vmatpush.msra.mxu0 %v487
        %499 = vmatpush.msra.mxu0 %v486
        %500 = vmatpush.msra.mxu0 %v485
        %501 = vmatpush.msra.mxu0 %v484
        %502 = vmatpush.msra.mxu0 %v483
        %503 = vmatpush.msra.mxu0 %v482
        %504 = vmatpush.msra.mxu0 %v481
        %505 = vmatpush.msra.mxu0 %v480
        %506 = vmatpush.msra.mxu0 %v479
        %507 = vmatpush.msra.mxu0 %v478
        %508 = vmatpush.msra.mxu0 %v477
        %509 = vmatpush.msra.mxu0 %v476
        %510 = vmatpush.msra.mxu0 %v475
        %511 = vmatmul.f32.gmra.mxu0 %v473
        %v512 = vpop.f32.mrf.mxu0
        %v513 = vadd.f32 %v493, %v512
        %514 = vdwg.mxu0
        %515 = vst [vmem:[%s341] sm:$0xff] %v513
        %p516 = scmp.eq.s32.totalorder %s25, 7
        // Predicated region
        $region53: #{maingru_forward.7} parent=39 // pred_check
          %p517 = pneg %p516
        $region54: #{maingru_forward.7} parent=39 // pred_check_branch
          %519 = sbr.rel (%p517) target = $region56
        $region55: #{maingru_forward.7} parent=39 // pred_region
          %520 = vst [vmem:[%s345] sm:$0xff] %v473
        $region56: #{maingru_forward.7} parent=39 // pred_fallthru
          _
        %p521 = scmp.lt.s32.totalorder %s25, 7
        %s522 = scalar_select %p521, %s25, 7
        %p523 = scmp.lt.s32.totalorder %s24, 0
        %s524 = scalar_select %p523, %s24, 0
        %s525 = sadd.s32 %s524, %s522
        %s526 = smul.addr %s525, 8
        %s527 = scalar_lea.vmem %s5, %s526
        %p528 = scmp.lt.s32.totalorder %s24, 0
        %s529 = scalar_select %p528, %s24, 0
        %s530 = smul.addr %s529, 8
        %s531 = scalar_lea.vmem %s6, %s530
        // Predicated region
        $region57: #{maingru_forward.7} parent=39 // pred_check
          %p532 = pneg %p169
        $region58: #{maingru_forward.7} parent=39 // pred_check_branch
          %534 = sbr.rel (%p532) target = $region60
        $region59: #{maingru_forward.7} parent=39 // pred_region
          _
        $region60: #{maingru_forward.7} parent=39 // pred_fallthru
          _
        // Predicated region
        $region61: #{maingru_forward.7} parent=39 // pred_check
          %p535 = pneg %p195
        $region62: #{maingru_forward.7} parent=39 // pred_check_branch
          %537 = sbr.rel (%p535) target = $region64
        $region63: #{maingru_forward.7} parent=39 // pred_region
          _
        $region64: #{maingru_forward.7} parent=39 // pred_fallthru
          _
        // Predicated region
        $region65: #{maingru_forward.7} parent=39 // pred_check
          %p538 = pneg %p195
        $region66: #{maingru_forward.7} parent=39 // pred_check_branch
          %540 = sbr.rel (%p538) target = $region68
        $region67: #{maingru_forward.7} parent=39 // pred_region
          %p541 = scmp.lt.s32.totalorder %s24, 0
          %s542 = scalar_select %p541, %s24, 0
          %s543 = smul.addr %s542, 8
          %s544 = scalar_lea.vmem %s6, %s543
        $region68: #{maingru_forward.7} parent=39 // pred_fallthru
          _
      $region40: #{maingru_forward.7} parent=5 // pred_fallthru
        _
      %p545 = scmp.le.s32.totalorder 2, %s15
      // Predicated region
      $region69: #{maingru_forward.7} parent=5 // pred_check
        %p546 = pneg %p545
      $region70: #{maingru_forward.7} parent=5 // pred_check_branch
        %548 = sbr.rel (%p546) target = $region72
      $region71: #{maingru_forward.7} parent=5 // pred_region
        %s549 = ssub.s32 %s15, 2
        // Predicated region
        $region73: #{maingru_forward.7} parent=71 // pred_check
          %p550 = pneg %p175
        $region74: #{maingru_forward.7} parent=71 // pred_check_branch
          %552 = sbr.rel (%p550) target = $region76
        $region75: #{maingru_forward.7} parent=71 // pred_region
          %p553 = scmp.lt.s32.totalorder %s27, 7
          %s554 = scalar_select %p553, %s27, 7
          %p555 = scmp.lt.s32.totalorder %s26, 0
          %s556 = scalar_select %p555, %s26, 0
          %s557 = sadd.s32 %s556, %s554
          %s558 = smul.addr %s557, 8
          %s559 = scalar_lea.vmem %s5, %s558
        $region76: #{maingru_forward.7} parent=71 // pred_fallthru
          _
      $region72: #{maingru_forward.7} parent=5 // pred_fallthru
        _
    $region6: #{maingru_forward.7} parent=1 // loop_footer
      %s19 = sadd.s32 1, %s15
    $region7: #{maingru_forward.7} parent=1 // loop_footer_branch
      %14 = sbr.rel target = $region3
    $region8: #{maingru_forward.7} parent=1 // loop_exit
      _
    %560 = vsyncpa [#allocation4], 1
    %s561 = scalar_lea.sflag [#allocation4], 1
    %562 = vsyncpa %s561, 1
    %563 = vsyncpa [#allocation6], 1

</llo_original>
